<compile_context>
chip_gen: v7x
topology: tpu7x:2x2x1
jax: 0.10.0
libtpu: 0.0.40
codegen_flags: <defaults>
</compile_context>

<pallas_src>
import jax
import jax.numpy as jnp
import numpy as np
from jax.experimental import pallas as pl
from jax.experimental.pallas import tpu as pltpu

LANE = 128


def _round_up(n, m):
    return ((n + m - 1) // m) * m


def _pad_to(x, size, axis):
    pad = size - x.shape[axis]
    if pad <= 0:
        return x
    widths = [(0, 0)] * x.ndim
    widths[axis] = (0, pad)
    return jnp.pad(x, widths)


# ---------------------------------------------------------------------------
# Pass 1: per-pixel projections (each pixel touched exactly once).
#   qk = relu(x @ wkq + bkq)          (shared query/key, scale pre-folded) -> bf16
#   v  = x @ wv + bv                                                      -> bf16
#   xw = x @ wc_x + bc_total          (feats half of concat-conv + biases)-> f32
# ---------------------------------------------------------------------------
def proj_kernel(x_ref, wkq_ref, bkq_ref, wv_ref, bv_ref, wcx_ref, bct_ref,
                qk_ref, v_ref, xw_ref):
    x = x_ref[0]                                                       # (TP, Cp) f32
    qk = jnp.dot(x, wkq_ref[...], preferred_element_type=jnp.float32) + bkq_ref[...]
    qk_ref[0] = jnp.maximum(qk, 0.0).astype(qk_ref.dtype)
    v = jnp.dot(x, wv_ref[...], preferred_element_type=jnp.float32) + bv_ref[...]
    v_ref[0] = v.astype(v_ref.dtype)
    xw_ref[0] = (jnp.dot(x, wcx_ref[...], preferred_element_type=jnp.float32)
                 + bct_ref[...]).astype(xw_ref.dtype)


# ---------------------------------------------------------------------------
# Pass 2: flash-attention (online softmax, deferred normalization) + fused
#         output conv.  Grid = (batch, query-tile, kv-tile); kv innermost.
# ---------------------------------------------------------------------------
def attn_kernel(q_ref, k_ref, v_ref, xw_ref, wf_ref, o_ref,
                m_sc, l_sc, acc_sc):
    ki = pl.program_id(2)
    nk = pl.num_programs(2)

    @pl.when(ki == 0)
    def _():
        m_sc[...] = jnp.full_like(m_sc, -jnp.inf)
        l_sc[...] = jnp.zeros_like(l_sc)
        acc_sc[...] = jnp.zeros_like(acc_sc)

    # sim tile: (TQ, TK) f32 from bf16 inputs (MXU, f32 accumulation).
    s = jax.lax.dot_general(q_ref[0], k_ref[0], (((1,), (1,)), ((), ())),
                            preferred_element_type=jnp.float32)

    m_prev = m_sc[...]
    m_new = jnp.maximum(m_prev, jnp.max(s, axis=-1, keepdims=True))
    alpha = jnp.exp(m_prev - m_new)
    p = jnp.exp(s - m_new)                                             # un-normalized
    l_sc[...] = alpha * l_sc[...] + jnp.sum(p, axis=-1, keepdims=True)
    acc_sc[...] = alpha * acc_sc[...] + jnp.dot(
        p.astype(jnp.bfloat16), v_ref[0], preferred_element_type=jnp.float32)
    m_sc[...] = m_new

    @pl.when(ki == nk - 1)
    def _():
        inv_l = pl.reciprocal(l_sc[...], approx=True)
        ctx = acc_sc[...] * inv_l                                      # (TQ, Vcp) f32
        # W conv + context-half of concat conv folded into one matmul; biases and the
        # feats-half of the concat conv already live in xw.  BN folded; Dropout2d = id.
        out = jnp.dot(ctx, wf_ref[...], preferred_element_type=jnp.float32) + xw_ref[0]
        o_ref[0] = jnp.maximum(out, 0.0).astype(o_ref.dtype)


def baseoc_forward(feats_nchw, params, *, tq=256, tk=256, tp=512):
    """feats_nchw: (N, C, H, W) f32 -> (N, Co, H, W) f32."""
    N, C, H, W = feats_nchw.shape
    HW = H * W
    wkq, bkq, wv, bv, ww, bw, wc_ctx, wc_x, bc = params
    Kc = wkq.shape[1]
    Vc = wv.shape[1]
    Co = bc.shape[1]

    tq = min(tq, HW)
    tk = min(tk, HW)
    tp = min(tp, HW)
    assert HW % tq == 0 and HW % tk == 0 and HW % tp == 0, \
        "HW must be a multiple of the tile sizes"

    hp = jax.lax.Precision.HIGHEST
    # Fold Kc^-0.25 into the shared f_key/f_query conv: (c*q)·(c*k) = Kc^-0.5 * (q·k).
    c = float(Kc) ** (-0.25)
    wkq_s = wkq * c
    bkq_s = bkq * c
    # Fold W (Vc->Cs) and the context half of conv_bn_dropout (Cs->Co) into one matmul,
    # and fold every bias into one per-output bias carried by the xw tensor.
    w_fused = jnp.einsum("vs,so->vo", ww, wc_ctx, precision=hp)        # (Vc, Co)
    bc_total = bc + jnp.einsum("is,so->io", bw, wc_ctx, precision=hp)  # (1, Co)

    # Lane-pad every channel dim to a multiple of 128 (zero padding is exact).
    Cp = _round_up(C, LANE)
    Kcp = _round_up(Kc, LANE)
    Vcp = _round_up(Vc, LANE)
    Cop = _round_up(Co, LANE)

    # TODO(synk): the NCHW<->NHWC transpose is a full mem-bound XLA pass each way;
    # keep the surrounding model in NHWC to eliminate it in production.
    x = jnp.transpose(feats_nchw, (0, 2, 3, 1)).reshape(N, HW, C).astype(jnp.float32)
    x = _pad_to(x, Cp, axis=2)

    wkq_p = _pad_to(_pad_to(wkq_s, Cp, 0), Kcp, 1)
    bkq_p = _pad_to(bkq_s, Kcp, 1)
    wv_p = _pad_to(_pad_to(wv, Cp, 0), Vcp, 1)
    bv_p = _pad_to(bv, Vcp, 1)
    wcx_p = _pad_to(_pad_to(wc_x, Cp, 0), Cop, 1)
    bct_p = _pad_to(bc_total, Cop, 1)
    wf_p = _pad_to(_pad_to(w_fused, Vcp, 0), Cop, 1)

    full2 = lambda a: pl.BlockSpec(a.shape, lambda b, i: (0, 0))
    full3 = lambda a: pl.BlockSpec(a.shape, lambda b, qi, ki: (0, 0))

    # ---- Pass 1: projections -------------------------------------------------
    qk, v, xw = pl.pallas_call(
        proj_kernel,
        out_shape=(jax.ShapeDtypeStruct((N, HW, Kcp), jnp.bfloat16),
                   jax.ShapeDtypeStruct((N, HW, Vcp), jnp.bfloat16),
                   jax.ShapeDtypeStruct((N, HW, Cop), jnp.float32)),
        grid_spec=pltpu.PrefetchScalarGridSpec(
            num_scalar_prefetch=0,
            grid=(N, HW // tp),
            in_specs=[
                pl.BlockSpec((1, tp, Cp), lambda b, i: (b, i, 0)),
                full2(wkq_p), full2(bkq_p),
                full2(wv_p), full2(bv_p),
                full2(wcx_p), full2(bct_p),
            ],
            out_specs=[
                pl.BlockSpec((1, tp, Kcp), lambda b, i: (b, i, 0)),
                pl.BlockSpec((1, tp, Vcp), lambda b, i: (b, i, 0)),
                pl.BlockSpec((1, tp, Cop), lambda b, i: (b, i, 0)),
            ]),
        compiler_params=pltpu.CompilerParams(
            dimension_semantics=("parallel", "parallel"),
            vmem_limit_bytes=64 * 1024 * 1024),
    )(x, wkq_p, bkq_p, wv_p, bv_p, wcx_p, bct_p)

    # ---- Pass 2: flash attention + fused output conv --------------------------
    out = pl.pallas_call(
        attn_kernel,
        out_shape=jax.ShapeDtypeStruct((N, HW, Cop), jnp.float32),
        grid_spec=pltpu.PrefetchScalarGridSpec(
            num_scalar_prefetch=0,
            grid=(N, HW // tq, HW // tk),
            in_specs=[
                pl.BlockSpec((1, tq, Kcp), lambda b, qi, ki: (b, qi, 0)),  # query tile
                pl.BlockSpec((1, tk, Kcp), lambda b, qi, ki: (b, ki, 0)),  # key tile
                pl.BlockSpec((1, tk, Vcp), lambda b, qi, ki: (b, ki, 0)),  # value tile
                pl.BlockSpec((1, tq, Cop), lambda b, qi, ki: (b, qi, 0)),  # x@wc_x + bias
                full3(wf_p),
            ],
            out_specs=pl.BlockSpec((1, tq, Cop), lambda b, qi, ki: (b, qi, 0)),
            scratch_shapes=[
                pltpu.VMEM((tq, 1), jnp.float32),     # running row max
                pltpu.VMEM((tq, 1), jnp.float32),     # running row sum
                pltpu.VMEM((tq, Vcp), jnp.float32),   # running context accumulator
            ]),
        compiler_params=pltpu.CompilerParams(
            dimension_semantics=("parallel", "parallel", "arbitrary"),
            vmem_limit_bytes=64 * 1024 * 1024),
    )(qk, qk, v, xw, wf_p)

    out = out[:, :, :Co]
    return jnp.transpose(out.reshape(N, H, W, Co), (0, 3, 1, 2))


def make_params(key, in_channels, out_channels, key_channels, value_channels, eps=1e-5):
    """Deterministic synthetic parameters; BN (running stats) folded into conv1x1."""
    ks = jax.random.split(key, 12)

    # f_key / f_query shared: Conv1x1(C->Kc) + BN(Kc) + ReLU
    w_key = 0.2 * jax.random.normal(ks[0], (key_channels, in_channels), jnp.float32)
    b_key = 0.1 * jax.random.normal(ks[1], (key_channels,), jnp.float32)
    gamma_k = 1.0 + 0.1 * jax.random.normal(ks[2], (key_channels,), jnp.float32)
    beta_k = 0.1 * jax.random.normal(ks[3], (key_channels,), jnp.float32)
    rm_k = jnp.zeros((key_channels,), jnp.float32)
    rv_k = jnp.ones((key_channels,), jnp.float32)
    sc_k = gamma_k / jnp.sqrt(rv_k + eps)
    wkq = (w_key * sc_k[:, None]).T                     # (C, Kc)
    bkq = ((b_key - rm_k) * sc_k + beta_k)[None, :]     # (1, Kc)

    # f_value: Conv1x1(C->Vc)
    w_val = 0.2 * jax.random.normal(ks[4], (value_channels, in_channels), jnp.float32)
    b_val = 0.1 * jax.random.normal(ks[5], (value_channels,), jnp.float32)
    wv = w_val.T                                        # (C, Vc)
    bv = b_val[None, :]                                 # (1, Vc)

    # W: Conv1x1(Vc->Cs).  Reference zero-inits this; use small nonzero values
    # so the attention path actually contributes in the test.
    w_W = 0.2 * jax.random.normal(ks[6], (out_channels, value_channels), jnp.float32)
    b_W = 0.05 * jax.random.normal(ks[7], (out_channels,), jnp.float32)
    ww = w_W.T                                          # (Vc, Cs)
    bw = b_W[None, :]                                   # (1, Cs)

    # conv_bn_dropout: Conv1x1(2C->Co) + BN(Co) + ReLU + Dropout2d
    w_c = 0.2 * jax.random.normal(ks[8], (out_channels, 2 * in_channels), jnp.float32)
    b_c = 0.1 * jax.random.normal(ks[9], (out_channels,), jnp.float32)
    gamma_c = 1.0 + 0.1 * jax.random.normal(ks[10], (out_channels,), jnp.float32)
    beta_c = 0.1 * jax.random.normal(ks[11], (out_channels,), jnp.float32)
    rm_c = jnp.zeros((out_channels,), jnp.float32)
    rv_c = jnp.ones((out_channels,), jnp.float32)
    sc_c = gamma_c / jnp.sqrt(rv_c + eps)
    w_c_f = w_c * sc_c[:, None]                         # (Co, 2C)
    b_c_f = (b_c - rm_c) * sc_c + beta_c
    wc_ctx = w_c_f[:, :out_channels].T                  # (Cs, Co)  (context half of cat)
    wc_x = w_c_f[:, out_channels:].T                    # (C,  Co)  (feats half of cat)
    bc = b_c_f[None, :]                                 # (1, Co)

    return (wkq, bkq, wv, bv, ww, bw, wc_ctx, wc_x, bc)


def reference_forward(feats_nchw, params):
    """Pure-JAX f32 reference of the module math (for a sanity check)."""
    N, C, H, W = feats_nchw.shape
    x = jnp.transpose(feats_nchw, (0, 2, 3, 1)).reshape(N, H * W, C).astype(jnp.float32)
    wkq, bkq, wv, bv, ww, bw, wc_ctx, wc_x, bc = params
    hp = jax.lax.Precision.HIGHEST
    kq = jnp.maximum(jnp.einsum("npc,ck->npk", x, wkq, precision=hp) + bkq, 0.0)
    val = jnp.einsum("npc,cv->npv", x, wv, precision=hp) + bv
    sim = jnp.einsum("npk,nqk->npq", kq, kq, precision=hp) * (wkq.shape[1] ** -0.5)
    sim = jax.nn.softmax(sim, axis=-1)
    ctx = jnp.einsum("npq,nqv->npv", sim, val, precision=hp)
    ctx = jnp.einsum("npv,vs->nps", ctx, ww, precision=hp) + bw
    out = jnp.maximum(jnp.einsum("nps,so->npo", ctx, wc_ctx, precision=hp)
                      + jnp.einsum("npc,co->npo", x, wc_x, precision=hp) + bc, 0.0)
    Co = bc.shape[1]
    return jnp.transpose(out.reshape(N, H, W, Co), (0, 3, 1, 2))


if __name__ == "__main__":
    key = jax.random.PRNGKey(0)
    N, C, H, W = 2, 4, 16, 16            # small NCHW input, consistent with the module
    in_channels = out_channels = C        # cat([context, feats]) -> 2*in_channels
    key_channels = value_channels = 8

    k_x, k_p = jax.random.split(key)
    feats = jax.random.normal(k_x, (N, C, H, W), jnp.float32)
    params = make_params(k_p, in_channels, out_channels, key_channels, value_channels)

    out = baseoc_forward(feats, params)
    out = jax.block_until_ready(out)

    ref = reference_forward(feats, params)
    assert out.shape == (N, out_channels, H, W)
    # Tolerance accounts for bf16 inputs to the two HW^2 matmuls (f32 accumulation).
    np.testing.assert_allclose(np.asarray(out), np.asarray(ref), rtol=2e-2, atol=2e-2)

    print("KERNEL_OK")
</pallas_src>

<mosaic_0001>
module attributes {stable_mosaic.version = 11 : i64} {
  func.func @proj_kernel(%arg0: i32, %arg1: i32, %arg2: memref<1x256x128xf32, #tpu.memory_space<vmem>>, %arg3: memref<128x128xf32, #tpu.memory_space<vmem>>, %arg4: memref<1x128xf32, #tpu.memory_space<vmem>>, %arg5: memref<128x128xf32, #tpu.memory_space<vmem>>, %arg6: memref<1x128xf32, #tpu.memory_space<vmem>>, %arg7: memref<128x128xf32, #tpu.memory_space<vmem>>, %arg8: memref<1x128xf32, #tpu.memory_space<vmem>>, %arg9: memref<1x256x128xbf16, #tpu.memory_space<vmem>>, %arg10: memref<1x256x128xbf16, #tpu.memory_space<vmem>>, %arg11: memref<1x256x128xf32, #tpu.memory_space<vmem>>) attributes {dimension_semantics = [#tpu.dimension_semantics<parallel>, #tpu.dimension_semantics<parallel>], iteration_bounds = array<i64: 2, 1>, scalar_prefetch = 0 : i64, scratch_operands = 0 : i64, tpu.core_type = #tpu.core_type<tc>, window_params = [{transform_indices = @transform_0, window_bounds = array<i64: 1, 256, 128>}, {pipeline_mode = #tpu.pipeline_mode<synchronous>, transform_indices = @transform_1, window_bounds = array<i64: 128, 128>}, {pipeline_mode = #tpu.pipeline_mode<synchronous>, transform_indices = @transform_2, window_bounds = array<i64: 1, 128>}, {pipeline_mode = #tpu.pipeline_mode<synchronous>, transform_indices = @transform_3, window_bounds = array<i64: 128, 128>}, {pipeline_mode = #tpu.pipeline_mode<synchronous>, transform_indices = @transform_4, window_bounds = array<i64: 1, 128>}, {pipeline_mode = #tpu.pipeline_mode<synchronous>, transform_indices = @transform_5, window_bounds = array<i64: 128, 128>}, {pipeline_mode = #tpu.pipeline_mode<synchronous>, transform_indices = @transform_6, window_bounds = array<i64: 1, 128>}, {transform_indices = @transform_7, window_bounds = array<i64: 1, 256, 128>}, {transform_indices = @transform_8, window_bounds = array<i64: 1, 256, 128>}, {transform_indices = @transform_9, window_bounds = array<i64: 1, 256, 128>}]} {
    %c0 = arith.constant 0 : index
    %c0_0 = arith.constant 0 : index
    %c0_1 = arith.constant 0 : index
    %0 = vector.load %arg2[%c0, %c0_0, %c0_1] : memref<1x256x128xf32, #tpu.memory_space<vmem>>, vector<1x256x128xf32>
    %1 = vector.shape_cast %0 : vector<1x256x128xf32> to vector<256x128xf32>
    %c0_2 = arith.constant 0 : index
    %c0_3 = arith.constant 0 : index
    %2 = vector.load %arg3[%c0_2, %c0_3] : memref<128x128xf32, #tpu.memory_space<vmem>>, vector<128x128xf32>
    %cst = arith.constant dense<0.000000e+00> : vector<256x128xf32>
    %3 = tpu.matmul %1, %2, %cst {dimension_numbers = #tpu.dot_dimension_numbers<[1], [0], [0], [1], [0, 0, 1, 1], [], []>} : vector<256x128xf32>, vector<128x128xf32>, vector<256x128xf32> -> vector<256x128xf32>
    %c0_4 = arith.constant 0 : index
    %c0_5 = arith.constant 0 : index
    %4 = vector.load %arg4[%c0_4, %c0_5] : memref<1x128xf32, #tpu.memory_space<vmem>>, vector<1x128xf32>
    %5 = vector.broadcast %4 : vector<1x128xf32> to vector<256x128xf32>
    %6 = arith.addf %3, %5 : vector<256x128xf32>
    %cst_6 = arith.constant 0.000000e+00 : f32
    %7 = vector.broadcast %cst_6 : f32 to vector<256x128xf32>
    %8 = arith.maximumf %6, %7 : vector<256x128xf32>
    %9 = arith.truncf %8 : vector<256x128xf32> to vector<256x128xbf16>
    %c0_7 = arith.constant 0 : index
    %c0_8 = arith.constant 0 : index
    %c0_9 = arith.constant 0 : index
    %10 = vector.load %arg9[%c0_7, %c0_8, %c0_9] : memref<1x256x128xbf16, #tpu.memory_space<vmem>>, vector<1x256x128xbf16>
    %11 = vector.shape_cast %10 : vector<1x256x128xbf16> to vector<256x128xbf16>
    %12 = vector.shape_cast %9 : vector<256x128xbf16> to vector<1x256x128xbf16>
    tpu.vector_store %arg9[%c0_7, %c0_8, %c0_9], %12 {strides = array<i32>} : memref<1x256x128xbf16, #tpu.memory_space<vmem>>, vector<1x256x128xbf16>,
    %c0_10 = arith.constant 0 : index
    %c0_11 = arith.constant 0 : index
    %13 = vector.load %arg5[%c0_10, %c0_11] : memref<128x128xf32, #tpu.memory_space<vmem>>, vector<128x128xf32>
    %cst_12 = arith.constant dense<0.000000e+00> : vector<256x128xf32>
    %14 = tpu.matmul %1, %13, %cst_12 {dimension_numbers = #tpu.dot_dimension_numbers<[1], [0], [0], [1], [0, 0, 1, 1], [], []>} : vector<256x128xf32>, vector<128x128xf32>, vector<256x128xf32> -> vector<256x128xf32>
    %c0_13 = arith.constant 0 : index
    %c0_14 = arith.constant 0 : index
    %15 = vector.load %arg6[%c0_13, %c0_14] : memref<1x128xf32, #tpu.memory_space<vmem>>, vector<1x128xf32>
    %16 = vector.broadcast %15 : vector<1x128xf32> to vector<256x128xf32>
    %17 = arith.addf %14, %16 : vector<256x128xf32>
    %18 = arith.truncf %17 : vector<256x128xf32> to vector<256x128xbf16>
    %c0_15 = arith.constant 0 : index
    %c0_16 = arith.constant 0 : index
    %c0_17 = arith.constant 0 : index
    %19 = vector.load %arg10[%c0_15, %c0_16, %c0_17] : memref<1x256x128xbf16, #tpu.memory_space<vmem>>, vector<1x256x128xbf16>
    %20 = vector.shape_cast %19 : vector<1x256x128xbf16> to vector<256x128xbf16>
    %21 = vector.shape_cast %18 : vector<256x128xbf16> to vector<1x256x128xbf16>
    tpu.vector_store %arg10[%c0_15, %c0_16, %c0_17], %21 {strides = array<i32>} : memref<1x256x128xbf16, #tpu.memory_space<vmem>>, vector<1x256x128xbf16>,
    %c0_18 = arith.constant 0 : index
    %c0_19 = arith.constant 0 : index
    %22 = vector.load %arg7[%c0_18, %c0_19] : memref<128x128xf32, #tpu.memory_space<vmem>>, vector<128x128xf32>
    %cst_20 = arith.constant dense<0.000000e+00> : vector<256x128xf32>
    %23 = tpu.matmul %1, %22, %cst_20 {dimension_numbers = #tpu.dot_dimension_numbers<[1], [0], [0], [1], [0, 0, 1, 1], [], []>} : vector<256x128xf32>, vector<128x128xf32>, vector<256x128xf32> -> vector<256x128xf32>
    %c0_21 = arith.constant 0 : index
    %c0_22 = arith.constant 0 : index
    %24 = vector.load %arg8[%c0_21, %c0_22] : memref<1x128xf32, #tpu.memory_space<vmem>>, vector<1x128xf32>
    %25 = vector.broadcast %24 : vector<1x128xf32> to vector<256x128xf32>
    %26 = arith.addf %23, %25 : vector<256x128xf32>
    %c0_23 = arith.constant 0 : index
    %c0_24 = arith.constant 0 : index
    %c0_25 = arith.constant 0 : index
    %27 = vector.load %arg11[%c0_23, %c0_24, %c0_25] : memref<1x256x128xf32, #tpu.memory_space<vmem>>, vector<1x256x128xf32>
    %28 = vector.shape_cast %27 : vector<1x256x128xf32> to vector<256x128xf32>
    %29 = vector.shape_cast %26 : vector<256x128xf32> to vector<1x256x128xf32>
    tpu.vector_store %arg11[%c0_23, %c0_24, %c0_25], %29 {strides = array<i32>} : memref<1x256x128xf32, #tpu.memory_space<vmem>>, vector<1x256x128xf32>,
    return
  }
  func.func @transform_0(%arg0: i32, %arg1: i32) -> (i32, i32, i32) {
    %c0_i32 = arith.constant 0 : i32
    %c0_i32_0 = arith.constant 0 : i32
    return %arg0, %arg1, %c0_i32 : i32, i32, i32
  }
  func.func @transform_1(%arg0: i32, %arg1: i32) -> (i32, i32) {
    %c0_i32 = arith.constant 0 : i32
    %c0_i32_0 = arith.constant 0 : i32
    %c0_i32_1 = arith.constant 0 : i32
    return %c0_i32, %c0_i32_0 : i32, i32
  }
  func.func @transform_2(%arg0: i32, %arg1: i32) -> (i32, i32) {
    %c0_i32 = arith.constant 0 : i32
    %c0_i32_0 = arith.constant 0 : i32
    %c0_i32_1 = arith.constant 0 : i32
    return %c0_i32, %c0_i32_0 : i32, i32
  }
  func.func @transform_3(%arg0: i32, %arg1: i32) -> (i32, i32) {
    %c0_i32 = arith.constant 0 : i32
    %c0_i32_0 = arith.constant 0 : i32
    %c0_i32_1 = arith.constant 0 : i32
    return %c0_i32, %c0_i32_0 : i32, i32
  }
  func.func @transform_4(%arg0: i32, %arg1: i32) -> (i32, i32) {
    %c0_i32 = arith.constant 0 : i32
    %c0_i32_0 = arith.constant 0 : i32
    %c0_i32_1 = arith.constant 0 : i32
    return %c0_i32, %c0_i32_0 : i32, i32
  }
  func.func @transform_5(%arg0: i32, %arg1: i32) -> (i32, i32) {
    %c0_i32 = arith.constant 0 : i32
    %c0_i32_0 = arith.constant 0 : i32
    %c0_i32_1 = arith.constant 0 : i32
    return %c0_i32, %c0_i32_0 : i32, i32
  }
  func.func @transform_6(%arg0: i32, %arg1: i32) -> (i32, i32) {
    %c0_i32 = arith.constant 0 : i32
    %c0_i32_0 = arith.constant 0 : i32
    %c0_i32_1 = arith.constant 0 : i32
    return %c0_i32, %c0_i32_0 : i32, i32
  }
  func.func @transform_7(%arg0: i32, %arg1: i32) -> (i32, i32, i32) {
    %c0_i32 = arith.constant 0 : i32
    %c0_i32_0 = arith.constant 0 : i32
    return %arg0, %arg1, %c0_i32 : i32, i32, i32
  }
  func.func @transform_8(%arg0: i32, %arg1: i32) -> (i32, i32, i32) {
    %c0_i32 = arith.constant 0 : i32
    %c0_i32_0 = arith.constant 0 : i32
    return %arg0, %arg1, %c0_i32 : i32, i32, i32
  }
  func.func @transform_9(%arg0: i32, %arg1: i32) -> (i32, i32, i32) {
    %c0_i32 = arith.constant 0 : i32
    %c0_i32_0 = arith.constant 0 : i32
    return %arg0, %arg1, %c0_i32 : i32, i32, i32
  }
}

</mosaic_0001>

<llo_original>
// kernel: tpu_custom_call.1
$region0: #{tpu_custom_call.1}
  #allocation0 [shape = 'u32[]', space=smem, size = 0x4, offset = 0x4, fixed_abs, tag = 'smem constant byte address 0x4 - core index']
  #allocation1 [shape = 'u32[144,128]{1,0:T(1,128)}', space=vmem, size = 0x12000, scoped, tag = 'internal scratch']
  %s0 = inlined_call_operand.hbm [shape: f32[2,256,128], index: 0, kind: input, shape index: {}]
  %s1 = inlined_call_operand.hbm [shape: f32[128,128], index: 1, kind: input, shape index: {}]
  %s2 = inlined_call_operand.hbm [shape: f32[1,128], index: 2, kind: input, shape index: {}]
  %s3 = inlined_call_operand.hbm [shape: f32[128,128], index: 3, kind: input, shape index: {}]
  %s4 = inlined_call_operand.hbm [shape: f32[1,128], index: 4, kind: input, shape index: {}]
  %s5 = inlined_call_operand.hbm [shape: f32[128,128], index: 5, kind: input, shape index: {}]
  %s6 = inlined_call_operand.hbm [shape: f32[1,128], index: 6, kind: input, shape index: {}]
  %s7 = inlined_call_operand.hbm [shape: bf16[2,256,128], index: 7, kind: output, shape index: {0}]
  %s8 = inlined_call_operand.hbm [shape: bf16[2,256,128], index: 8, kind: output, shape index: {1}]
  %s9 = inlined_call_operand.hbm [shape: f32[2,256,128], index: 9, kind: output, shape index: {2}]
  %10 = xla_tuple %s7, %s8, %s9
  %s11 = sld [smem:[#allocation0]]
  $region105: #{tpu_custom_call.1} parent=0
    _
  %s13 = ssub.s32 1, %s11
  %s14 = scalar_select 0, %s13, %s11
  $region1: #{tpu_custom_call.1} parent=0
    #allocation2 [shape = 'u8[262144]{0}', space=vmem, size = 0x40000, scoped, tag = 'input window, operand 0']
    #allocation3 [shape = 's32[2]{0}', space=sflag, size = 0x8, scoped, tag = 'scoped memory for tpu_custom_call.1']
    #allocation4 [shape = 's32[2]{0}', space=sflag, size = 0x8, scoped, tag = 'scoped memory for tpu_custom_call.1']
    #allocation5 [shape = 'u8[65536]{0}', space=vmem, size = 0x10000, scoped, tag = 'input window, operand 1, single buffered']
    #allocation6 [shape = 's32[1]{0}', space=sflag, size = 0x4, scoped, tag = 'scoped memory for tpu_custom_call.1']
    #allocation7 [shape = 'u8[512]{0}', space=vmem, size = 0x400, scoped, tag = 'input window, operand 2, single buffered']
    #allocation8 [shape = 'u8[65536]{0}', space=vmem, size = 0x10000, scoped, tag = 'input window, operand 3, single buffered']
    #allocation9 [shape = 's32[1]{0}', space=sflag, size = 0x4, scoped, tag = 'scoped memory for tpu_custom_call.1']
    #allocation10 [shape = 'u8[512]{0}', space=vmem, size = 0x400, scoped, tag = 'input window, operand 4, single buffered']
    #allocation11 [shape = 'u8[65536]{0}', space=vmem, size = 0x10000, scoped, tag = 'input window, operand 5, single buffered']
    #allocation12 [shape = 's32[1]{0}', space=sflag, size = 0x4, scoped, tag = 'scoped memory for tpu_custom_call.1']
    #allocation13 [shape = 'u8[512]{0}', space=vmem, size = 0x400, scoped, tag = 'input window, operand 6, single buffered']
    #allocation14 [shape = 'u8[131072]{0}', space=vmem, size = 0x20000, scoped, tag = 'output window, operand 0']
    #allocation15 [shape = 'u8[131072]{0}', space=vmem, size = 0x20000, scoped, tag = 'output window, operand 1']
    #allocation16 [shape = 's32[2]{0}', space=sflag, size = 0x8, scoped, tag = 'scoped memory for tpu_custom_call.1']
    #allocation17 [shape = 'u8[262144]{0}', space=vmem, size = 0x40000, scoped, tag = 'output window, operand 2']
    %15 = vsyncpa [#allocation3], 0
    %s16 = scalar_lea.sflag [#allocation3], 1
    %17 = vsyncpa %s16, 0
    %18 = vsyncpa [#allocation6], 0
    %19 = vsyncpa [#allocation9], 0
    %20 = vsyncpa [#allocation12], 0
    %21 = vsyncpa [#allocation4], 0
    %s22 = scalar_lea.sflag [#allocation4], 1
    %23 = vsyncpa %s22, 0
    %24 = vsyncpa [#allocation16], 0
    %s25 = scalar_lea.sflag [#allocation16], 1
    %26 = vsyncpa %s25, 0
    loop: start=0, step=1, limit=4
    $region2: #{tpu_custom_call.1} parent=1 // loop_pre_header
      _
    $region3: #{tpu_custom_call.1} parent=1 // loop_header
      %s28 = sphi 0, %s32
      %p29 = scmp.ge.s32.totalorder %s28, 4
      %s35 = sphi 0, %s47
      %s36 = sphi 0, %s43
      %s37 = sphi 0, %s35
      %s38 = sphi 0, %s36
      %s39 = sphi 0, %s37
      %s40 = sphi 0, %s38
      %s52 = sphi 0, %s54
      %s55 = sphi 0, %s52
      %s56 = sphi 0, %s55
      %s72 = sphi 0, %s56
      %s76 = sphi 0, %s76
      %s78 = sphi 0, %s76
      %s79 = sphi 0, %s78
      %s93 = sphi 0, %s79
      %s97 = sphi 0, %s97
      %s99 = sphi 0, %s97
      %s100 = sphi 0, %s99
      %s114 = sphi 0, %s100
      %s118 = sphi 0, %s118
      %s120 = sphi 0, %s118
      %s121 = sphi 0, %s120
      %s135 = sphi 0, %s121
      %s139 = sphi 0, %s139
      %s141 = sphi 0, %s139
      %s142 = sphi 0, %s141
      %s156 = sphi 0, %s142
      %s160 = sphi 0, %s160
      %s162 = sphi 0, %s160
      %s163 = sphi 0, %s162
      %s177 = sphi 0, %s163
      %s181 = sphi 0, %s181
      %s183 = sphi 0, %s181
      %s184 = sphi 0, %s183
      %s198 = sphi 0, %s184
      %s206 = sphi 0, %s208
      %s209 = sphi 0, %s206
      %s210 = sphi 0, %s209
      %s226 = sphi 0, %s210
      %s234 = sphi 0, %s236
      %s237 = sphi 0, %s234
      %s238 = sphi 0, %s237
      %s254 = sphi 0, %s238
      %s262 = sphi 0, %s264
      %s265 = sphi 0, %s262
      %s266 = sphi 0, %s265
      %s282 = sphi 0, %s266
    $region4: #{tpu_custom_call.1} parent=1 // loop_header_branch
      %31 = sbr.rel (%p29) target = $region8
    $region5: #{tpu_custom_call.1} parent=1 // loop_body
      %s33 = ssub.s32 %s28, 1
      %s34 = ssub.s32 %s28, 2
      %s41 = sadd.s32 1, %s36
      %p42 = scmp.ge.s32.totalorder %s41, 1
      %s43 = scalar_select %p42, 0, %s41
      %s44 = sadd.s32 1, %s35
      %s45 = scalar_select %p42, %s44, %s35
      %p46 = scmp.ge.s32.totalorder %s45, 2
      %s47 = scalar_select %p46, 0, %s45
      %s48 = ssub.s32 %s35, %s47
      %s49 = ssub.s32 %s36, %s43
      %s50 = sor.u32 %s48, %s49
      %p51 = scmp.eq.s32.totalorder %s50, 0
      %s53 = sadd.s32 %s52, 1
      %s54 = scalar_select %p51, %s52, %s53
      %p57 = pneg %p51
      %p58 = scmp.eq.s32.totalorder %s28, 1
      %p59 = por %p57, %p58
      %p60 = scmp.ne.s32.totalorder %s52, %s55
      %p61 = scmp.eq.s32.totalorder %s28, 0
      %p62 = por %p60, %p61
      %p63 = scmp.ne.s32.totalorder %s52, %s55
      %p64 = scmp.eq.s32.totalorder %s33, 1
      %p65 = por %p63, %p64
      %p66 = scmp.ne.s32.totalorder %s55, %s56
      %p67 = scmp.eq.s32.totalorder %s33, 0
      %p68 = por %p66, %p67
      %p69 = scmp.ne.s32.totalorder %s55, %s56
      %p70 = scmp.eq.s32.totalorder %s34, 1
      %p71 = por %p69, %p70
      %p73 = scmp.ne.s32.totalorder %s56, %s72
      %p74 = scmp.eq.s32.totalorder %s34, 0
      %p75 = por %p73, %p74
      %s77 = sadd.s32 %s76, 1
      %p80 = scmp.eq.s32.totalorder %s28, 1
      %p81 = scmp.ne.s32.totalorder %s76, %s78
      %p82 = scmp.eq.s32.totalorder %s28, 0
      %p83 = por %p81, %p82
      %p84 = scmp.ne.s32.totalorder %s76, %s78
      %p85 = scmp.eq.s32.totalorder %s33, 1
      %p86 = por %p84, %p85
      %p87 = scmp.ne.s32.totalorder %s78, %s79
      %p88 = scmp.eq.s32.totalorder %s33, 0
      %p89 = por %p87, %p88
      %p90 = scmp.ne.s32.totalorder %s78, %s79
      %p91 = scmp.eq.s32.totalorder %s34, 1
      %p92 = por %p90, %p91
      %p94 = scmp.ne.s32.totalorder %s79, %s93
      %p95 = scmp.eq.s32.totalorder %s34, 0
      %p96 = por %p94, %p95
      %s98 = sadd.s32 %s97, 1
      %p101 = scmp.eq.s32.totalorder %s28, 1
      %p102 = scmp.ne.s32.totalorder %s97, %s99
      %p103 = scmp.eq.s32.totalorder %s28, 0
      %p104 = por %p102, %p103
      %p105 = scmp.ne.s32.totalorder %s97, %s99
      %p106 = scmp.eq.s32.totalorder %s33, 1
      %p107 = por %p105, %p106
      %p108 = scmp.ne.s32.totalorder %s99, %s100
      %p109 = scmp.eq.s32.totalorder %s33, 0
      %p110 = por %p108, %p109
      %p111 = scmp.ne.s32.totalorder %s99, %s100
      %p112 = scmp.eq.s32.totalorder %s34, 1
      %p113 = por %p111, %p112
      %p115 = scmp.ne.s32.totalorder %s100, %s114
      %p116 = scmp.eq.s32.totalorder %s34, 0
      %p117 = por %p115, %p116
      %s119 = sadd.s32 %s118, 1
      %p122 = scmp.eq.s32.totalorder %s28, 1
      %p123 = scmp.ne.s32.totalorder %s118, %s120
      %p124 = scmp.eq.s32.totalorder %s28, 0
      %p125 = por %p123, %p124
      %p126 = scmp.ne.s32.totalorder %s118, %s120
      %p127 = scmp.eq.s32.totalorder %s33, 1
      %p128 = por %p126, %p127
      %p129 = scmp.ne.s32.totalorder %s120, %s121
      %p130 = scmp.eq.s32.totalorder %s33, 0
      %p131 = por %p129, %p130
      %p132 = scmp.ne.s32.totalorder %s120, %s121
      %p133 = scmp.eq.s32.totalorder %s34, 1
      %p134 = por %p132, %p133
      %p136 = scmp.ne.s32.totalorder %s121, %s135
      %p137 = scmp.eq.s32.totalorder %s34, 0
      %p138 = por %p136, %p137
      %s140 = sadd.s32 %s139, 1
      %p143 = scmp.eq.s32.totalorder %s28, 1
      %p144 = scmp.ne.s32.totalorder %s139, %s141
      %p145 = scmp.eq.s32.totalorder %s28, 0
      %p146 = por %p144, %p145
      %p147 = scmp.ne.s32.totalorder %s139, %s141
      %p148 = scmp.eq.s32.totalorder %s33, 1
      %p149 = por %p147, %p148
      %p150 = scmp.ne.s32.totalorder %s141, %s142
      %p151 = scmp.eq.s32.totalorder %s33, 0
      %p152 = por %p150, %p151
      %p153 = scmp.ne.s32.totalorder %s141, %s142
      %p154 = scmp.eq.s32.totalorder %s34, 1
      %p155 = por %p153, %p154
      %p157 = scmp.ne.s32.totalorder %s142, %s156
      %p158 = scmp.eq.s32.totalorder %s34, 0
      %p159 = por %p157, %p158
      %s161 = sadd.s32 %s160, 1
      %p164 = scmp.eq.s32.totalorder %s28, 1
      %p165 = scmp.ne.s32.totalorder %s160, %s162
      %p166 = scmp.eq.s32.totalorder %s28, 0
      %p167 = por %p165, %p166
      %p168 = scmp.ne.s32.totalorder %s160, %s162
      %p169 = scmp.eq.s32.totalorder %s33, 1
      %p170 = por %p168, %p169
      %p171 = scmp.ne.s32.totalorder %s162, %s163
      %p172 = scmp.eq.s32.totalorder %s33, 0
      %p173 = por %p171, %p172
      %p174 = scmp.ne.s32.totalorder %s162, %s163
      %p175 = scmp.eq.s32.totalorder %s34, 1
      %p176 = por %p174, %p175
      %p178 = scmp.ne.s32.totalorder %s163, %s177
      %p179 = scmp.eq.s32.totalorder %s34, 0
      %p180 = por %p178, %p179
      %s182 = sadd.s32 %s181, 1
      %p185 = scmp.eq.s32.totalorder %s28, 1
      %p186 = scmp.ne.s32.totalorder %s181, %s183
      %p187 = scmp.eq.s32.totalorder %s28, 0
      %p188 = por %p186, %p187
      %p189 = scmp.ne.s32.totalorder %s181, %s183
      %p190 = scmp.eq.s32.totalorder %s33, 1
      %p191 = por %p189, %p190
      %p192 = scmp.ne.s32.totalorder %s183, %s184
      %p193 = scmp.eq.s32.totalorder %s33, 0
      %p194 = por %p192, %p193
      %p195 = scmp.ne.s32.totalorder %s183, %s184
      %p196 = scmp.eq.s32.totalorder %s34, 1
      %p197 = por %p195, %p196
      %p199 = scmp.ne.s32.totalorder %s184, %s198
      %p200 = scmp.eq.s32.totalorder %s34, 0
      %p201 = por %p199, %p200
      %s202 = ssub.s32 %s35, %s47
      %s203 = ssub.s32 %s36, %s43
      %s204 = sor.u32 %s202, %s203
      %p205 = scmp.eq.s32.totalorder %s204, 0
      %s207 = sadd.s32 %s206, 1
      %s208 = scalar_select %p205, %s206, %s207
      %p211 = pneg %p205
      %p212 = scmp.eq.s32.totalorder %s28, 1
      %p213 = por %p211, %p212
      %p214 = scmp.ne.s32.totalorder %s206, %s209
      %p215 = scmp.eq.s32.totalorder %s28, 0
      %p216 = por %p214, %p215
      %p217 = scmp.ne.s32.totalorder %s206, %s209
      %p218 = scmp.eq.s32.totalorder %s33, 1
      %p219 = por %p217, %p218
      %p220 = scmp.ne.s32.totalorder %s209, %s210
      %p221 = scmp.eq.s32.totalorder %s33, 0
      %p222 = por %p220, %p221
      %p223 = scmp.ne.s32.totalorder %s209, %s210
      %p224 = scmp.eq.s32.totalorder %s34, 1
      %p225 = por %p223, %p224
      %p227 = scmp.ne.s32.totalorder %s210, %s226
      %p228 = scmp.eq.s32.totalorder %s34, 0
      %p229 = por %p227, %p228
      %s230 = ssub.s32 %s35, %s47
      %s231 = ssub.s32 %s36, %s43
      %s232 = sor.u32 %s230, %s231
      %p233 = scmp.eq.s32.totalorder %s232, 0
      %s235 = sadd.s32 %s234, 1
      %s236 = scalar_select %p233, %s234, %s235
      %p239 = pneg %p233
      %p240 = scmp.eq.s32.totalorder %s28, 1
      %p241 = por %p239, %p240
      %p242 = scmp.ne.s32.totalorder %s234, %s237
      %p243 = scmp.eq.s32.totalorder %s28, 0
      %p244 = por %p242, %p243
      %p245 = scmp.ne.s32.totalorder %s234, %s237
      %p246 = scmp.eq.s32.totalorder %s33, 1
      %p247 = por %p245, %p246
      %p248 = scmp.ne.s32.totalorder %s237, %s238
      %p249 = scmp.eq.s32.totalorder %s33, 0
      %p250 = por %p248, %p249
      %p251 = scmp.ne.s32.totalorder %s237, %s238
      %p252 = scmp.eq.s32.totalorder %s34, 1
      %p253 = por %p251, %p252
      %p255 = scmp.ne.s32.totalorder %s238, %s254
      %p256 = scmp.eq.s32.totalorder %s34, 0
      %p257 = por %p255, %p256
      %s258 = ssub.s32 %s35, %s47
      %s259 = ssub.s32 %s36, %s43
      %s260 = sor.u32 %s258, %s259
      %p261 = scmp.eq.s32.totalorder %s260, 0
      %s263 = sadd.s32 %s262, 1
      %s264 = scalar_select %p261, %s262, %s263
      %p267 = pneg %p261
      %p268 = scmp.eq.s32.totalorder %s28, 1
      %p269 = por %p267, %p268
      %p270 = scmp.ne.s32.totalorder %s262, %s265
      %p271 = scmp.eq.s32.totalorder %s28, 0
      %p272 = por %p270, %p271
      %p273 = scmp.ne.s32.totalorder %s262, %s265
      %p274 = scmp.eq.s32.totalorder %s33, 1
      %p275 = por %p273, %p274
      %p276 = scmp.ne.s32.totalorder %s265, %s266
      %p277 = scmp.eq.s32.totalorder %s33, 0
      %p278 = por %p276, %p277
      %p279 = scmp.ne.s32.totalorder %s265, %s266
      %p280 = scmp.eq.s32.totalorder %s34, 1
      %p281 = por %p279, %p280
      %p283 = scmp.ne.s32.totalorder %s266, %s282
      %p284 = scmp.eq.s32.totalorder %s34, 0
      %p285 = por %p283, %p284
      %p286 = scmp.le.s32.totalorder 1, %s28
      %p287 = scmp.lt.s32.totalorder %s28, 3
      %p288 = pnand %p286, %p287
      %p289 = pneg %p288
      // Predicated region
      $region9: #{tpu_custom_call.1} parent=5 // pred_check
        _
      $region10: #{tpu_custom_call.1} parent=5 // pred_check_branch
        %291 = sbr.rel (%p288) target = $region12
      $region11: #{tpu_custom_call.1} parent=5 // pred_region
        %s292 = ssub.s32 %s28, 1
        // Predicated region
        $region13: #{tpu_custom_call.1} parent=11 // pred_check
          %p293 = pneg %p89
        $region14: #{tpu_custom_call.1} parent=11 // pred_check_branch
          %295 = sbr.rel (%p293) target = $region16
        $region15: #{tpu_custom_call.1} parent=11 // pred_region
          %s297 = ssub.s32 2048, 2048
          %298 = vsyncadd [#allocation6], %s297
          %s299 = sshll.u32 [#allocation5], 4
          %s300 = int_to_ptr.vmem [resolvable:$true] %s299
          %305 = dma.hbm_to_vmem [thread:$0]  %s1, 2048, %s300, [#allocation6], 128, 128, 8
        $region16: #{tpu_custom_call.1} parent=11 // pred_fallthru
          _
        // Predicated region
        $region17: #{tpu_custom_call.1} parent=11 // pred_check
          %p306 = pneg %p110
        $region18: #{tpu_custom_call.1} parent=11 // pred_check_branch
          %308 = sbr.rel (%p306) target = $region20
        $region19: #{tpu_custom_call.1} parent=11 // pred_region
          %s310 = ssub.s32 16, 16
          %311 = vsyncadd [#allocation6], %s310
          %s313 = sshll.u32 [#allocation7], 4
          %s314 = int_to_ptr.vmem [resolvable:$true] %s313
          %316 = dma.hbm_to_vmem [thread:$0]  %s2, 16, %s314, [#allocation6]
        $region20: #{tpu_custom_call.1} parent=11 // pred_fallthru
          _
        // Predicated region
        $region21: #{tpu_custom_call.1} parent=11 // pred_check
          %p317 = pneg %p131
        $region22: #{tpu_custom_call.1} parent=11 // pred_check_branch
          %319 = sbr.rel (%p317) target = $region24
        $region23: #{tpu_custom_call.1} parent=11 // pred_region
          %s321 = ssub.s32 2048, 2048
          %322 = vsyncadd [#allocation9], %s321
          %s323 = sshll.u32 [#allocation8], 4
          %s324 = int_to_ptr.vmem [resolvable:$true] %s323
          %329 = dma.hbm_to_vmem [thread:$0]  %s3, 2048, %s324, [#allocation9], 128, 128, 8
        $region24: #{tpu_custom_call.1} parent=11 // pred_fallthru
          _
        // Predicated region
        $region25: #{tpu_custom_call.1} parent=11 // pred_check
          %p330 = pneg %p152
        $region26: #{tpu_custom_call.1} parent=11 // pred_check_branch
          %332 = sbr.rel (%p330) target = $region28
        $region27: #{tpu_custom_call.1} parent=11 // pred_region
          %s334 = ssub.s32 16, 16
          %335 = vsyncadd [#allocation9], %s334
          %s337 = sshll.u32 [#allocation10], 4
          %s338 = int_to_ptr.vmem [resolvable:$true] %s337
          %340 = dma.hbm_to_vmem [thread:$0]  %s4, 16, %s338, [#allocation9]
        $region28: #{tpu_custom_call.1} parent=11 // pred_fallthru
          _
        // Predicated region
        $region29: #{tpu_custom_call.1} parent=11 // pred_check
          %p341 = pneg %p173
        $region30: #{tpu_custom_call.1} parent=11 // pred_check_branch
          %343 = sbr.rel (%p341) target = $region32
        $region31: #{tpu_custom_call.1} parent=11 // pred_region
          %s345 = ssub.s32 2048, 2048
          %346 = vsyncadd [#allocation12], %s345
          %s347 = sshll.u32 [#allocation11], 4
          %s348 = int_to_ptr.vmem [resolvable:$true] %s347
          %353 = dma.hbm_to_vmem [thread:$0]  %s5, 2048, %s348, [#allocation12], 128, 128, 8
        $region32: #{tpu_custom_call.1} parent=11 // pred_fallthru
          _
        // Predicated region
        $region33: #{tpu_custom_call.1} parent=11 // pred_check
          %p354 = pneg %p194
        $region34: #{tpu_custom_call.1} parent=11 // pred_check_branch
          %356 = sbr.rel (%p354) target = $region36
        $region35: #{tpu_custom_call.1} parent=11 // pred_region
          %s358 = ssub.s32 16, 16
          %359 = vsyncadd [#allocation12], %s358
          %s361 = sshll.u32 [#allocation13], 4
          %s362 = int_to_ptr.vmem [resolvable:$true] %s361
          %364 = dma.hbm_to_vmem [thread:$0]  %s6, 16, %s362, [#allocation12]
        $region36: #{tpu_custom_call.1} parent=11 // pred_fallthru
          _
      $region12: #{tpu_custom_call.1} parent=5 // pred_fallthru
        _
      %p365 = scmp.lt.s32.totalorder %s28, 2
      // Predicated region
      $region37: #{tpu_custom_call.1} parent=5 // pred_check
        %p366 = pneg %p365
      $region38: #{tpu_custom_call.1} parent=5 // pred_check_branch
        %368 = sbr.rel (%p366) target = $region40
      $region39: #{tpu_custom_call.1} parent=5 // pred_region
        // Predicated region
        $region41: #{tpu_custom_call.1} parent=39 // pred_check
          %p369 = pneg %p62
        $region42: #{tpu_custom_call.1} parent=39 // pred_check_branch
          %371 = sbr.rel (%p369) target = $region44
        $region43: #{tpu_custom_call.1} parent=39 // pred_region
          %s372 = sand.u32 %s52, 1
          %s373 = scalar_lea.sflag [#allocation3], %s372
          %s374 = sand.u32 %s52, 1
          %s375 = smul.addr %s374, 256
          %s376 = scalar_lea.vmem [#allocation2], %s375
          %s377 = smul.u32 32, %s36
          %s379 = ssub.s32 4096, 4096
          %380 = vsyncadd %s373, %s379
          %s381 = smul.addr %s35, 32
          %s382 = sadd.s32 %s377, %s381
          %s383 = smul.addr %s382, 128
          %s384 = scalar_lea.hbm %s0, %s383
          %s385 = sshll.u32 %s376, 4
          %s386 = int_to_ptr.vmem [resolvable:$true] %s385
          %391 = dma.hbm_to_vmem [thread:$0]  %s384, 4096, %s386, %s373, 128, 128, 8
        $region44: #{tpu_custom_call.1} parent=39 // pred_fallthru
          _
      $region40: #{tpu_custom_call.1} parent=5 // pred_fallthru
        _
      %p392 = scmp.le.s32.totalorder 1, %s28
      %p393 = scmp.lt.s32.totalorder %s28, 3
      %p394 = pnand %p392, %p393
      %p395 = pneg %p394
      // Predicated region
      $region45: #{tpu_custom_call.1} parent=5 // pred_check
        _
      $region46: #{tpu_custom_call.1} parent=5 // pred_check_branch
        %397 = sbr.rel (%p394) target = $region48
      $region47: #{tpu_custom_call.1} parent=5 // pred_region
        %s398 = ssub.s32 %s28, 1
        %s399 = sand.u32 %s55, 1
        %s400 = scalar_lea.sflag [#allocation3], %s399
        %s401 = sand.u32 %s55, 1
        %s402 = smul.addr %s401, 256
        %s403 = scalar_lea.vmem [#allocation2], %s402
        // Predicated region
        $region49: #{tpu_custom_call.1} parent=47 // pred_check
          %p404 = pneg %p68
        $region50: #{tpu_custom_call.1} parent=47 // pred_check_branch
          %406 = sbr.rel (%p404) target = $region52
        $region51: #{tpu_custom_call.1} parent=47 // pred_region
          %407 = dma.done %s400, 4096
        $region52: #{tpu_custom_call.1} parent=47 // pred_fallthru
          _
        // Predicated region
        $region53: #{tpu_custom_call.1} parent=47 // pred_check
          %p408 = pneg %p89
        $region54: #{tpu_custom_call.1} parent=47 // pred_check_branch
          %410 = sbr.rel (%p408) target = $region56
        $region55: #{tpu_custom_call.1} parent=47 // pred_region
          %411 = dma.done [#allocation6], 2048
        $region56: #{tpu_custom_call.1} parent=47 // pred_fallthru
          _
        // Predicated region
        $region57: #{tpu_custom_call.1} parent=47 // pred_check
          %p412 = pneg %p110
        $region58: #{tpu_custom_call.1} parent=47 // pred_check_branch
          %414 = sbr.rel (%p412) target = $region60
        $region59: #{tpu_custom_call.1} parent=47 // pred_region
          %415 = dma.done [#allocation6], 16
        $region60: #{tpu_custom_call.1} parent=47 // pred_fallthru
          _
        // Predicated region
        $region61: #{tpu_custom_call.1} parent=47 // pred_check
          %p416 = pneg %p131
        $region62: #{tpu_custom_call.1} parent=47 // pred_check_branch
          %418 = sbr.rel (%p416) target = $region64
        $region63: #{tpu_custom_call.1} parent=47 // pred_region
          %419 = dma.done [#allocation9], 2048
        $region64: #{tpu_custom_call.1} parent=47 // pred_fallthru
          _
        // Predicated region
        $region65: #{tpu_custom_call.1} parent=47 // pred_check
          %p420 = pneg %p152
        $region66: #{tpu_custom_call.1} parent=47 // pred_check_branch
          %422 = sbr.rel (%p420) target = $region68
        $region67: #{tpu_custom_call.1} parent=47 // pred_region
          %423 = dma.done [#allocation9], 16
        $region68: #{tpu_custom_call.1} parent=47 // pred_fallthru
          _
        // Predicated region
        $region69: #{tpu_custom_call.1} parent=47 // pred_check
          %p424 = pneg %p173
        $region70: #{tpu_custom_call.1} parent=47 // pred_check_branch
          %426 = sbr.rel (%p424) target = $region72
        $region71: #{tpu_custom_call.1} parent=47 // pred_region
          %427 = dma.done [#allocation12], 2048
        $region72: #{tpu_custom_call.1} parent=47 // pred_fallthru
          _
        // Predicated region
        $region73: #{tpu_custom_call.1} parent=47 // pred_check
          %p428 = pneg %p194
        $region74: #{tpu_custom_call.1} parent=47 // pred_check_branch
          %430 = sbr.rel (%p428) target = $region76
        $region75: #{tpu_custom_call.1} parent=47 // pred_region
          %431 = dma.done [#allocation12], 16
        $region76: #{tpu_custom_call.1} parent=47 // pred_fallthru
          _
        %s432 = sand.u32 %s55, 1
        %s433 = scalar_lea.sflag [#allocation3], %s432
        %s434 = sand.u32 %s55, 1
        %s435 = smul.addr %s434, 256
        %s436 = scalar_lea.vmem [#allocation2], %s435
        %p437 = pneg %p68
        %p438 = pneg %p65
        %p439 = pneg %p89
        %p440 = pneg %p86
        %p441 = pneg %p110
        %p442 = pneg %p107
        %p443 = pneg %p131
        %p444 = pneg %p128
        %p445 = pneg %p152
        %p446 = pneg %p149
        %p447 = pneg %p173
        %p448 = pneg %p170
        %p449 = pneg %p194
        %p450 = pneg %p191
        %p451 = pneg %p222
        %p452 = pneg %p219
        %s453 = sand.u32 %s209, 1
        %s454 = scalar_lea.sflag [#allocation4], %s453
        %s455 = sand.u32 %s209, 1
        %s456 = smul.addr %s455, 128
        %s457 = scalar_lea.vmem [#allocation14], %s456
        %p458 = pneg %p250
        %p459 = pneg %p247
        %s460 = sand.u32 %s33, 1
        %s461 = scalar_lea.sflag [#allocation16], %s460
        %s462 = sand.u32 %s237, 1
        %s463 = smul.addr %s462, 128
        %s464 = scalar_lea.vmem [#allocation15], %s463
        %p465 = pneg %p278
        %p466 = pneg %p275
        %s467 = sand.u32 %s33, 1
        %s468 = scalar_lea.sflag [#allocation16], %s467
        %s469 = sand.u32 %s265, 1
        %s470 = smul.addr %s469, 256
        %s471 = scalar_lea.vmem [#allocation17], %s470
        %s472 = smul.u32 32, %s38
        %s473 = smul.u32 32, %s38
        %s474 = smul.u32 32, %s38
        %s475 = smul.u32 32, %s38
        %v476 = vld [vmem:[%s403] sm:$0xff]
        %v477 = vld [vmem:[%s403 + $0x8] sm:$0xff]
        %v478 = vld [vmem:[%s403 + $0x10] sm:$0xff]
        %v479 = vld [vmem:[%s403 + $0x18] sm:$0xff]
        %v480 = vld [vmem:[%s403 + $0x20] sm:$0xff]
        %v481 = vld [vmem:[%s403 + $0x28] sm:$0xff]
        %v482 = vld [vmem:[%s403 + $0x30] sm:$0xff]
        %v483 = vld [vmem:[%s403 + $0x38] sm:$0xff]
        %v484 = vld [vmem:[%s403 + $0x40] sm:$0xff]
        %v485 = vld [vmem:[%s403 + $0x48] sm:$0xff]
        %v486 = vld [vmem:[%s403 + $0x50] sm:$0xff]
        %v487 = vld [vmem:[%s403 + $0x58] sm:$0xff]
        %v488 = vld [vmem:[%s403 + $0x60] sm:$0xff]
        %v489 = vld [vmem:[%s403 + $0x68] sm:$0xff]
        %v490 = vld [vmem:[%s403 + $0x70] sm:$0xff]
        %v491 = vld [vmem:[%s403 + $0x78] sm:$0xff]
        %v492 = vld [vmem:[%s403 + $0x80] sm:$0xff]
        %v493 = vld [vmem:[%s403 + $0x88] sm:$0xff]
        %v494 = vld [vmem:[%s403 + $0x90] sm:$0xff]
        %v495 = vld [vmem:[%s403 + $0x98] sm:$0xff]
        %v496 = vld [vmem:[%s403 + $0xa0] sm:$0xff]
        %v497 = vld [vmem:[%s403 + $0xa8] sm:$0xff]
        %v498 = vld [vmem:[%s403 + $0xb0] sm:$0xff]
        %v499 = vld [vmem:[%s403 + $0xb8] sm:$0xff]
        %v500 = vld [vmem:[%s403 + $0xc0] sm:$0xff]
        %v501 = vld [vmem:[%s403 + $0xc8] sm:$0xff]
        %v502 = vld [vmem:[%s403 + $0xd0] sm:$0xff]
        %v503 = vld [vmem:[%s403 + $0xd8] sm:$0xff]
        %v504 = vld [vmem:[%s403 + $0xe0] sm:$0xff]
        %v505 = vld [vmem:[%s403 + $0xe8] sm:$0xff]
        %v506 = vld [vmem:[%s403 + $0xf0] sm:$0xff]
        %v507 = vld [vmem:[%s403 + $0xf8] sm:$0xff]
        %v508 = vld [vmem:[#allocation5] sm:$0xff]
        %v509 = vld [vmem:[#allocation5 + $0x8] sm:$0xff]
        %v510 = vld [vmem:[#allocation5 + $0x10] sm:$0xff]
        %v511 = vld [vmem:[#allocation5 + $0x18] sm:$0xff]
        %v512 = vld [vmem:[#allocation5 + $0x20] sm:$0xff]
        %v513 = vld [vmem:[#allocation5 + $0x28] sm:$0xff]
        %v514 = vld [vmem:[#allocation5 + $0x30] sm:$0xff]
        %v515 = vld [vmem:[#allocation5 + $0x38] sm:$0xff]
        %v516 = vld [vmem:[#allocation5 + $0x40] sm:$0xff]
        %v517 = vld [vmem:[#allocation5 + $0x48] sm:$0xff]
        %v518 = vld [vmem:[#allocation5 + $0x50] sm:$0xff]
        %v519 = vld [vmem:[#allocation5 + $0x58] sm:$0xff]
        %v520 = vld [vmem:[#allocation5 + $0x60] sm:$0xff]
        %v521 = vld [vmem:[#allocation5 + $0x68] sm:$0xff]
        %v522 = vld [vmem:[#allocation5 + $0x70] sm:$0xff]
        %v523 = vld [vmem:[#allocation5 + $0x78] sm:$0xff]
        %v524 = vld [vmem:[#allocation7] sm:$0x1]
        %v526 = vlaneseq
        %v527 = vshrl.u32 %v526, 7
        %v528 = vsub.s32 0, %v527
        %v529 = vrot.slane %v524, %v528
        %531 = vmatprep.subr.mxu0 0.0
        %532 = vmatpush1.msra.mxu0 %v508
        %533 = vmatprep.subr.mxu0 0.0
        %534 = vmatpush1.msra.mxu0 %v509
        %535 = vmatprep.subr.mxu0 0.0
        %536 = vmatpush1.msra.mxu0 %v510
        %537 = vmatprep.subr.mxu0 0.0
        %538 = vmatpush1.msra.mxu0 %v511
        %539 = vmatprep.subr.mxu0 0.0
        %540 = vmatpush1.msra.mxu0 %v512
        %541 = vmatprep.subr.mxu0 0.0
        %542 = vmatpush1.msra.mxu0 %v513
        %543 = vmatprep.subr.mxu0 0.0
        %544 = vmatpush1.msra.mxu0 %v514
        %545 = vmatprep.subr.mxu0 0.0
        %546 = vmatpush1.msra.mxu0 %v515
        %547 = vmatprep.subr.mxu0 0.0
        %548 = vmatpush1.msra.mxu0 %v516
        %549 = vmatprep.subr.mxu0 0.0
        %550 = vmatpush1.msra.mxu0 %v517
        %551 = vmatprep.subr.mxu0 0.0
        %552 = vmatpush1.msra.mxu0 %v518
        %553 = vmatprep.subr.mxu0 0.0
        %554 = vmatpush1.msra.mxu0 %v519
        %555 = vmatprep.subr.mxu0 0.0
        %556 = vmatpush1.msra.mxu0 %v520
        %557 = vmatprep.subr.mxu0 0.0
        %558 = vmatpush1.msra.mxu0 %v521
        %559 = vmatprep.subr.mxu0 0.0
        %560 = vmatpush1.msra.mxu0 %v522
        %561 = vmatprep.subr.mxu0 0.0
        %562 = vmatpush1.msra.mxu0 %v523
        %563 = vmatprep.subr.mxu0 0.0
        %564 = vmatpush1.msra.mxu0 0.0
        %565 = vmatprep.subr.mxu0 0.0
        %566 = vmatpush1.msra.mxu0 0.0
        %567 = vmatprep.subr.mxu0 0.0
        %568 = vmatpush1.msra.mxu0 0.0
        %569 = vmatprep.subr.mxu0 0.0
        %570 = vmatpush1.msra.mxu0 0.0
        %571 = vmatprep.subr.mxu0 0.0
        %572 = vmatpush1.msra.mxu0 0.0
        %573 = vmatprep.subr.mxu0 0.0
        %574 = vmatpush1.msra.mxu0 0.0
        %575 = vmatprep.subr.mxu0 0.0
        %576 = vmatpush1.msra.mxu0 0.0
        %577 = vmatprep.subr.mxu0 0.0
        %578 = vmatpush1.msra.mxu0 0.0
        %579 = vmatprep.subr.mxu0 0.0
        %580 = vmatpush1.msra.mxu0 0.0
        %581 = vmatprep.subr.mxu0 0.0
        %582 = vmatpush1.msra.mxu0 0.0
        %583 = vmatprep.subr.mxu0 0.0
        %584 = vmatpush1.msra.mxu0 0.0
        %585 = vmatprep.subr.mxu0 0.0
        %586 = vmatpush1.msra.mxu0 0.0
        %587 = vmatprep.subr.mxu0 0.0
        %588 = vmatpush1.msra.mxu0 0.0
        %589 = vmatprep.subr.mxu0 0.0
        %590 = vmatpush1.msra.mxu0 0.0
        %591 = vmatprep.subr.mxu0 0.0
        %592 = vmatpush1.msra.mxu0 0.0
        %593 = vmatprep.subr.mxu0 0.0
        %594 = vmatpush1.msra.mxu0 0.0
        %595 = vmatprep.mubr.f32.mxu0 0.0
        %596 = vmatmul.mubr.f32.gmra.mrb[0].mxu0 %v476
        %v597 = vpop.f32.mrb[0].mxu0
        %v598 = vadd.f32 %v529, %v597
        %v599 = vpop.f32.mrb[0].mxu0
        %600 = vmatprep.mubr.f32.mxu0 0.0
        %601 = vmatmul.mubr.f32.gmra.mrb[0].mxu0 %v477
        %v602 = vpop.f32.mrb[0].mxu0
        %v603 = vadd.f32 %v529, %v602
        %v604 = vpop.f32.mrb[0].mxu0
        %605 = vmatprep.mubr.f32.mxu0 0.0
        %606 = vmatmul.mubr.f32.gmra.mrb[0].mxu0 %v478
        %v607 = vpop.f32.mrb[0].mxu0
        %v608 = vadd.f32 %v529, %v607
        %v609 = vpop.f32.mrb[0].mxu0
        %610 = vmatprep.mubr.f32.mxu0 0.0
        %611 = vmatmul.mubr.f32.gmra.mrb[0].mxu0 %v479
        %v612 = vpop.f32.mrb[0].mxu0
        %v613 = vadd.f32 %v529, %v612
        %v614 = vpop.f32.mrb[0].mxu0
        %615 = vmatprep.mubr.f32.mxu0 0.0
        %616 = vmatmul.mubr.f32.gmra.mrb[0].mxu0 %v480
        %v617 = vpop.f32.mrb[0].mxu0
        %v618 = vadd.f32 %v529, %v617
        %v619 = vpop.f32.mrb[0].mxu0
        %620 = vmatprep.mubr.f32.mxu0 0.0
        %621 = vmatmul.mubr.f32.gmra.mrb[0].mxu0 %v481
        %v622 = vpop.f32.mrb[0].mxu0
        %v623 = vadd.f32 %v529, %v622
        %v624 = vpop.f32.mrb[0].mxu0
        %625 = vmatprep.mubr.f32.mxu0 0.0
        %626 = vmatmul.mubr.f32.gmra.mrb[0].mxu0 %v482
        %v627 = vpop.f32.mrb[0].mxu0
        %v628 = vadd.f32 %v529, %v627
        %v629 = vpop.f32.mrb[0].mxu0
        %630 = vmatprep.mubr.f32.mxu0 0.0
        %631 = vmatmul.mubr.f32.gmra.mrb[0].mxu0 %v483
        %v632 = vpop.f32.mrb[0].mxu0
        %v633 = vadd.f32 %v529, %v632
        %v634 = vpop.f32.mrb[0].mxu0
        %635 = vmatprep.mubr.f32.mxu0 0.0
        %636 = vmatmul.mubr.f32.gmra.mrb[0].mxu0 %v484
        %v637 = vpop.f32.mrb[0].mxu0
        %v638 = vadd.f32 %v529, %v637
        %v639 = vpop.f32.mrb[0].mxu0
        %640 = vmatprep.mubr.f32.mxu0 0.0
        %641 = vmatmul.mubr.f32.gmra.mrb[0].mxu0 %v485
        %v642 = vpop.f32.mrb[0].mxu0
        %v643 = vadd.f32 %v529, %v642
        %v644 = vpop.f32.mrb[0].mxu0
        %645 = vmatprep.mubr.f32.mxu0 0.0
        %646 = vmatmul.mubr.f32.gmra.mrb[0].mxu0 %v486
        %v647 = vpop.f32.mrb[0].mxu0
        %v648 = vadd.f32 %v529, %v647
        %v649 = vpop.f32.mrb[0].mxu0
        %650 = vmatprep.mubr.f32.mxu0 0.0
        %651 = vmatmul.mubr.f32.gmra.mrb[0].mxu0 %v487
        %v652 = vpop.f32.mrb[0].mxu0
        %v653 = vadd.f32 %v529, %v652
        %v654 = vpop.f32.mrb[0].mxu0
        %655 = vmatprep.mubr.f32.mxu0 0.0
        %656 = vmatmul.mubr.f32.gmra.mrb[0].mxu0 %v488
        %v657 = vpop.f32.mrb[0].mxu0
        %v658 = vadd.f32 %v529, %v657
        %v659 = vpop.f32.mrb[0].mxu0
        %660 = vmatprep.mubr.f32.mxu0 0.0
        %661 = vmatmul.mubr.f32.gmra.mrb[0].mxu0 %v489
        %v662 = vpop.f32.mrb[0].mxu0
        %v663 = vadd.f32 %v529, %v662
        %v664 = vpop.f32.mrb[0].mxu0
        %665 = vmatprep.mubr.f32.mxu0 0.0
        %666 = vmatmul.mubr.f32.gmra.mrb[0].mxu0 %v490
        %v667 = vpop.f32.mrb[0].mxu0
        %v668 = vadd.f32 %v529, %v667
        %v669 = vpop.f32.mrb[0].mxu0
        %670 = vmatprep.mubr.f32.mxu0 0.0
        %671 = vmatmul.mubr.f32.gmra.mrb[0].mxu0 %v491
        %v672 = vpop.f32.mrb[0].mxu0
        %v673 = vadd.f32 %v529, %v672
        %v674 = vpop.f32.mrb[0].mxu0
        %675 = vmatprep.mubr.f32.mxu0 0.0
        %676 = vmatmul.mubr.f32.gmra.mrb[0].mxu0 %v492
        %v677 = vpop.f32.mrb[0].mxu0
        %v678 = vadd.f32 %v529, %v677
        %v679 = vpop.f32.mrb[0].mxu0
        %680 = vmatprep.mubr.f32.mxu0 0.0
        %681 = vmatmul.mubr.f32.gmra.mrb[0].mxu0 %v493
        %v682 = vpop.f32.mrb[0].mxu0
        %v683 = vadd.f32 %v529, %v682
        %v684 = vpop.f32.mrb[0].mxu0
        %685 = vmatprep.mubr.f32.mxu0 0.0
        %686 = vmatmul.mubr.f32.gmra.mrb[0].mxu0 %v494
        %v687 = vpop.f32.mrb[0].mxu0
        %v688 = vadd.f32 %v529, %v687
        %v689 = vpop.f32.mrb[0].mxu0
        %690 = vmatprep.mubr.f32.mxu0 0.0
        %691 = vmatmul.mubr.f32.gmra.mrb[0].mxu0 %v495
        %v692 = vpop.f32.mrb[0].mxu0
        %v693 = vadd.f32 %v529, %v692
        %v694 = vpop.f32.mrb[0].mxu0
        %695 = vmatprep.mubr.f32.mxu0 0.0
        %696 = vmatmul.mubr.f32.gmra.mrb[0].mxu0 %v496
        %v697 = vpop.f32.mrb[0].mxu0
        %v698 = vadd.f32 %v529, %v697
        %v699 = vpop.f32.mrb[0].mxu0
        %700 = vmatprep.mubr.f32.mxu0 0.0
        %701 = vmatmul.mubr.f32.gmra.mrb[0].mxu0 %v497
        %v702 = vpop.f32.mrb[0].mxu0
        %v703 = vadd.f32 %v529, %v702
        %v704 = vpop.f32.mrb[0].mxu0
        %705 = vmatprep.mubr.f32.mxu0 0.0
        %706 = vmatmul.mubr.f32.gmra.mrb[0].mxu0 %v498
        %v707 = vpop.f32.mrb[0].mxu0
        %v708 = vadd.f32 %v529, %v707
        %v709 = vpop.f32.mrb[0].mxu0
        %710 = vmatprep.mubr.f32.mxu0 0.0
        %711 = vmatmul.mubr.f32.gmra.mrb[0].mxu0 %v499
        %v712 = vpop.f32.mrb[0].mxu0
        %v713 = vadd.f32 %v529, %v712
        %v714 = vpop.f32.mrb[0].mxu0
        %715 = vmatprep.mubr.f32.mxu0 0.0
        %716 = vmatmul.mubr.f32.gmra.mrb[0].mxu0 %v500
        %v717 = vpop.f32.mrb[0].mxu0
        %v718 = vadd.f32 %v529, %v717
        %v719 = vpop.f32.mrb[0].mxu0
        %720 = vmatprep.mubr.f32.mxu0 0.0
        %721 = vmatmul.mubr.f32.gmra.mrb[0].mxu0 %v501
        %v722 = vpop.f32.mrb[0].mxu0
        %v723 = vadd.f32 %v529, %v722
        %v724 = vpop.f32.mrb[0].mxu0
        %725 = vmatprep.mubr.f32.mxu0 0.0
        %726 = vmatmul.mubr.f32.gmra.mrb[0].mxu0 %v502
        %v727 = vpop.f32.mrb[0].mxu0
        %v728 = vadd.f32 %v529, %v727
        %v729 = vpop.f32.mrb[0].mxu0
        %730 = vmatprep.mubr.f32.mxu0 0.0
        %731 = vmatmul.mubr.f32.gmra.mrb[0].mxu0 %v503
        %v732 = vpop.f32.mrb[0].mxu0
        %v733 = vadd.f32 %v529, %v732
        %v734 = vpop.f32.mrb[0].mxu0
        %735 = vmatprep.mubr.f32.mxu0 0.0
        %736 = vmatmul.mubr.f32.gmra.mrb[0].mxu0 %v504
        %v737 = vpop.f32.mrb[0].mxu0
        %v738 = vadd.f32 %v529, %v737
        %v739 = vpop.f32.mrb[0].mxu0
        %740 = vmatprep.mubr.f32.mxu0 0.0
        %741 = vmatmul.mubr.f32.gmra.mrb[0].mxu0 %v505
        %v742 = vpop.f32.mrb[0].mxu0
        %v743 = vadd.f32 %v529, %v742
        %v744 = vpop.f32.mrb[0].mxu0
        %745 = vmatprep.mubr.f32.mxu0 0.0
        %746 = vmatmul.mubr.f32.gmra.mrb[0].mxu0 %v506
        %v747 = vpop.f32.mrb[0].mxu0
        %v748 = vadd.f32 %v529, %v747
        %v749 = vpop.f32.mrb[0].mxu0
        %750 = vmatprep.mubr.f32.mxu0 0.0
        %751 = vmatmul.mubr.f32.gmra.mrb[0].mxu0 %v507
        %v752 = vpop.f32.mrb[0].mxu0
        %v753 = vadd.f32 %v529, %v752
        %v754 = vpop.f32.mrb[0].mxu0
        %755 = vdwg.mxu0
        %v756 = vmax.f32 %v598, 0.0
        %v757 = vmax.f32 %v603, 0.0
        %v758 = vmax.f32 %v608, 0.0
        %v759 = vmax.f32 %v613, 0.0
        %v760 = vmax.f32 %v618, 0.0
        %v761 = vmax.f32 %v623, 0.0
        %v762 = vmax.f32 %v628, 0.0
        %v763 = vmax.f32 %v633, 0.0
        %v764 = vmax.f32 %v638, 0.0
        %v765 = vmax.f32 %v643, 0.0
        %v766 = vmax.f32 %v648, 0.0
        %v767 = vmax.f32 %v653, 0.0
        %v768 = vmax.f32 %v658, 0.0
        %v769 = vmax.f32 %v663, 0.0
        %v770 = vmax.f32 %v668, 0.0
        %v771 = vmax.f32 %v673, 0.0
        %v772 = vmax.f32 %v678, 0.0
        %v773 = vmax.f32 %v683, 0.0
        %v774 = vmax.f32 %v688, 0.0
        %v775 = vmax.f32 %v693, 0.0
        %v776 = vmax.f32 %v698, 0.0
        %v777 = vmax.f32 %v703, 0.0
        %v778 = vmax.f32 %v708, 0.0
        %v779 = vmax.f32 %v713, 0.0
        %v780 = vmax.f32 %v718, 0.0
        %v781 = vmax.f32 %v723, 0.0
        %v782 = vmax.f32 %v728, 0.0
        %v783 = vmax.f32 %v733, 0.0
        %v784 = vmax.f32 %v738, 0.0
        %v785 = vmax.f32 %v743, 0.0
        %v786 = vmax.f32 %v748, 0.0
        %v787 = vmax.f32 %v753, 0.0
        %v788 = vpack.c.bf16 %v757, %v756
        %v789 = vpack.c.bf16 %v759, %v758
        %v790 = vpack.c.bf16 %v761, %v760
        %v791 = vpack.c.bf16 %v763, %v762
        %v792 = vpack.c.bf16 %v765, %v764
        %v793 = vpack.c.bf16 %v767, %v766
        %v794 = vpack.c.bf16 %v769, %v768
        %v795 = vpack.c.bf16 %v771, %v770
        %v796 = vpack.c.bf16 %v773, %v772
        %v797 = vpack.c.bf16 %v775, %v774
        %v798 = vpack.c.bf16 %v777, %v776
        %v799 = vpack.c.bf16 %v779, %v778
        %v800 = vpack.c.bf16 %v781, %v780
        %v801 = vpack.c.bf16 %v783, %v782
        %v802 = vpack.c.bf16 %v785, %v784
        %v803 = vpack.c.bf16 %v787, %v786
        %v820 = vunpack.c.l.b16 %v788
        %v821 = vunpack.c.h.b16 %v788
        %v822 = vunpack.c.l.b16 %v789
        %v823 = vunpack.c.h.b16 %v789
        %v824 = vunpack.c.l.b16 %v790
        %v825 = vunpack.c.h.b16 %v790
        %v826 = vunpack.c.l.b16 %v791
        %v827 = vunpack.c.h.b16 %v791
        %v828 = vunpack.c.l.b16 %v792
        %v829 = vunpack.c.h.b16 %v792
        %v830 = vunpack.c.l.b16 %v793
        %v831 = vunpack.c.h.b16 %v793
        %v832 = vunpack.c.l.b16 %v794
        %v833 = vunpack.c.h.b16 %v794
        %v834 = vunpack.c.l.b16 %v795
        %v835 = vunpack.c.h.b16 %v795
        %v836 = vunpack.c.l.b16 %v796
        %v837 = vunpack.c.h.b16 %v796
        %v838 = vunpack.c.l.b16 %v797
        %v839 = vunpack.c.h.b16 %v797
        %v840 = vunpack.c.l.b16 %v798
        %v841 = vunpack.c.h.b16 %v798
        %v842 = vunpack.c.l.b16 %v799
        %v843 = vunpack.c.h.b16 %v799
        %v844 = vunpack.c.l.b16 %v800
        %v845 = vunpack.c.h.b16 %v800
        %v846 = vunpack.c.l.b16 %v801
        %v847 = vunpack.c.h.b16 %v801
        %v848 = vunpack.c.l.b16 %v802
        %v849 = vunpack.c.h.b16 %v802
        %v850 = vunpack.c.l.b16 %v803
        %v851 = vunpack.c.h.b16 %v803
        %v852 = vpack.c.b16 %v820, %v820
        %v853 = vpack.c.b16 %v821, %v821
        %v854 = vpack.c.b16 %v822, %v822
        %v855 = vpack.c.b16 %v823, %v823
        %v856 = vpack.c.b16 %v824, %v824
        %v857 = vpack.c.b16 %v825, %v825
        %v858 = vpack.c.b16 %v826, %v826
        %v859 = vpack.c.b16 %v827, %v827
        %v860 = vpack.c.b16 %v828, %v828
        %v861 = vpack.c.b16 %v829, %v829
        %v862 = vpack.c.b16 %v830, %v830
        %v863 = vpack.c.b16 %v831, %v831
        %v864 = vpack.c.b16 %v832, %v832
        %v865 = vpack.c.b16 %v833, %v833
        %v866 = vpack.c.b16 %v834, %v834
        %v867 = vpack.c.b16 %v835, %v835
        %v868 = vpack.c.b16 %v836, %v836
        %v869 = vpack.c.b16 %v837, %v837
        %v870 = vpack.c.b16 %v838, %v838
        %v871 = vpack.c.b16 %v839, %v839
        %v872 = vpack.c.b16 %v840, %v840
        %v873 = vpack.c.b16 %v841, %v841
        %v874 = vpack.c.b16 %v842, %v842
        %v875 = vpack.c.b16 %v843, %v843
        %v876 = vpack.c.b16 %v844, %v844
        %v877 = vpack.c.b16 %v845, %v845
        %v878 = vpack.c.b16 %v846, %v846
        %v879 = vpack.c.b16 %v847, %v847
        %v880 = vpack.c.b16 %v848, %v848
        %v881 = vpack.c.b16 %v849, %v849
        %v882 = vpack.c.b16 %v850, %v850
        %v883 = vpack.c.b16 %v851, %v851
        %916 = vst [vmem:[%s457] sm:$0xf] %v852
        %917 = vst [vmem:[%s457 + $0x4] sm:$0xf] %v853
        %918 = vst [vmem:[%s457 + $0x8] sm:$0xf] %v854
        %919 = vst [vmem:[%s457 + $0xc] sm:$0xf] %v855
        %920 = vst [vmem:[%s457 + $0x10] sm:$0xf] %v856
        %921 = vst [vmem:[%s457 + $0x14] sm:$0xf] %v857
        %922 = vst [vmem:[%s457 + $0x18] sm:$0xf] %v858
        %923 = vst [vmem:[%s457 + $0x1c] sm:$0xf] %v859
        %924 = vst [vmem:[%s457 + $0x20] sm:$0xf] %v860
        %925 = vst [vmem:[%s457 + $0x24] sm:$0xf] %v861
        %926 = vst [vmem:[%s457 + $0x28] sm:$0xf] %v862
        %927 = vst [vmem:[%s457 + $0x2c] sm:$0xf] %v863
        %928 = vst [vmem:[%s457 + $0x30] sm:$0xf] %v864
        %929 = vst [vmem:[%s457 + $0x34] sm:$0xf] %v865
        %930 = vst [vmem:[%s457 + $0x38] sm:$0xf] %v866
        %931 = vst [vmem:[%s457 + $0x3c] sm:$0xf] %v867
        %932 = vst [vmem:[%s457 + $0x40] sm:$0xf] %v868
        %933 = vst [vmem:[%s457 + $0x44] sm:$0xf] %v869
        %934 = vst [vmem:[%s457 + $0x48] sm:$0xf] %v870
        %935 = vst [vmem:[%s457 + $0x4c] sm:$0xf] %v871
        %936 = vst [vmem:[%s457 + $0x50] sm:$0xf] %v872
        %937 = vst [vmem:[%s457 + $0x54] sm:$0xf] %v873
        %938 = vst [vmem:[%s457 + $0x58] sm:$0xf] %v874
        %939 = vst [vmem:[%s457 + $0x5c] sm:$0xf] %v875
        %940 = vst [vmem:[%s457 + $0x60] sm:$0xf] %v876
        %941 = vst [vmem:[%s457 + $0x64] sm:$0xf] %v877
        %942 = vst [vmem:[%s457 + $0x68] sm:$0xf] %v878
        %943 = vst [vmem:[%s457 + $0x6c] sm:$0xf] %v879
        %944 = vst [vmem:[%s457 + $0x70] sm:$0xf] %v880
        %945 = vst [vmem:[%s457 + $0x74] sm:$0xf] %v881
        %946 = vst [vmem:[%s457 + $0x78] sm:$0xf] %v882
        %947 = vst [vmem:[%s457 + $0x7c] sm:$0xf] %v883
        %v948 = vld [vmem:[#allocation8] sm:$0xff]
        %v949 = vld [vmem:[#allocation8 + $0x8] sm:$0xff]
        %v950 = vld [vmem:[#allocation8 + $0x10] sm:$0xff]
        %v951 = vld [vmem:[#allocation8 + $0x18] sm:$0xff]
        %v952 = vld [vmem:[#allocation8 + $0x20] sm:$0xff]
        %v953 = vld [vmem:[#allocation8 + $0x28] sm:$0xff]
        %v954 = vld [vmem:[#allocation8 + $0x30] sm:$0xff]
        %v955 = vld [vmem:[#allocation8 + $0x38] sm:$0xff]
        %v956 = vld [vmem:[#allocation8 + $0x40] sm:$0xff]
        %v957 = vld [vmem:[#allocation8 + $0x48] sm:$0xff]
        %v958 = vld [vmem:[#allocation8 + $0x50] sm:$0xff]
        %v959 = vld [vmem:[#allocation8 + $0x58] sm:$0xff]
        %v960 = vld [vmem:[#allocation8 + $0x60] sm:$0xff]
        %v961 = vld [vmem:[#allocation8 + $0x68] sm:$0xff]
        %v962 = vld [vmem:[#allocation8 + $0x70] sm:$0xff]
        %v963 = vld [vmem:[#allocation8 + $0x78] sm:$0xff]
        %v964 = vld [vmem:[#allocation10] sm:$0x1]
        %v966 = vlaneseq
        %v967 = vshrl.u32 %v966, 7
        %v968 = vsub.s32 0, %v967
        %v969 = vrot.slane %v964, %v968
        %971 = vmatprep.subr.mxu0 0.0
        %972 = vmatpush1.msra.mxu0 %v948
        %973 = vmatprep.subr.mxu0 0.0
        %974 = vmatpush1.msra.mxu0 %v949
        %975 = vmatprep.subr.mxu0 0.0
        %976 = vmatpush1.msra.mxu0 %v950
        %977 = vmatprep.subr.mxu0 0.0
        %978 = vmatpush1.msra.mxu0 %v951
        %979 = vmatprep.subr.mxu0 0.0
        %980 = vmatpush1.msra.mxu0 %v952
        %981 = vmatprep.subr.mxu0 0.0
        %982 = vmatpush1.msra.mxu0 %v953
        %983 = vmatprep.subr.mxu0 0.0
        %984 = vmatpush1.msra.mxu0 %v954
        %985 = vmatprep.subr.mxu0 0.0
        %986 = vmatpush1.msra.mxu0 %v955
        %987 = vmatprep.subr.mxu0 0.0
        %988 = vmatpush1.msra.mxu0 %v956
        %989 = vmatprep.subr.mxu0 0.0
        %990 = vmatpush1.msra.mxu0 %v957
        %991 = vmatprep.subr.mxu0 0.0
        %992 = vmatpush1.msra.mxu0 %v958
        %993 = vmatprep.subr.mxu0 0.0
        %994 = vmatpush1.msra.mxu0 %v959
        %995 = vmatprep.subr.mxu0 0.0
        %996 = vmatpush1.msra.mxu0 %v960
        %997 = vmatprep.subr.mxu0 0.0
        %998 = vmatpush1.msra.mxu0 %v961
        %999 = vmatprep.subr.mxu0 0.0
        %1000 = vmatpush1.msra.mxu0 %v962
        %1001 = vmatprep.subr.mxu0 0.0
        %1002 = vmatpush1.msra.mxu0 %v963
        %1003 = vmatprep.subr.mxu0 0.0
        %1004 = vmatpush1.msra.mxu0 0.0
        %1005 = vmatprep.subr.mxu0 0.0
        %1006 = vmatpush1.msra.mxu0 0.0
        %1007 = vmatprep.subr.mxu0 0.0
        %1008 = vmatpush1.msra.mxu0 0.0
        %1009 = vmatprep.subr.mxu0 0.0
        %1010 = vmatpush1.msra.mxu0 0.0
        %1011 = vmatprep.subr.mxu0 0.0
        %1012 = vmatpush1.msra.mxu0 0.0
        %1013 = vmatprep.subr.mxu0 0.0
        %1014 = vmatpush1.msra.mxu0 0.0
        %1015 = vmatprep.subr.mxu0 0.0
        %1016 = vmatpush1.msra.mxu0 0.0
        %1017 = vmatprep.subr.mxu0 0.0
        %1018 = vmatpush1.msra.mxu0 0.0
        %1019 = vmatprep.subr.mxu0 0.0
        %1020 = vmatpush1.msra.mxu0 0.0
        %1021 = vmatprep.subr.mxu0 0.0
        %1022 = vmatpush1.msra.mxu0 0.0
        %1023 = vmatprep.subr.mxu0 0.0
        %1024 = vmatpush1.msra.mxu0 0.0
        %1025 = vmatprep.subr.mxu0 0.0
        %1026 = vmatpush1.msra.mxu0 0.0
        %1027 = vmatprep.subr.mxu0 0.0
        %1028 = vmatpush1.msra.mxu0 0.0
        %1029 = vmatprep.subr.mxu0 0.0
        %1030 = vmatpush1.msra.mxu0 0.0
        %1031 = vmatprep.subr.mxu0 0.0
        %1032 = vmatpush1.msra.mxu0 0.0
        %1033 = vmatprep.subr.mxu0 0.0
        %1034 = vmatpush1.msra.mxu0 0.0
        %1035 = vmatprep.mubr.f32.mxu0 0.0
        %1036 = vmatmul.mubr.f32.gmra.mrb[0].mxu0 %v476
        %v1037 = vpop.f32.mrb[0].mxu0
        %v1038 = vadd.f32 %v969, %v1037
        %v1039 = vpop.f32.mrb[0].mxu0
        %1040 = vmatprep.mubr.f32.mxu0 0.0
        %1041 = vmatmul.mubr.f32.gmra.mrb[0].mxu0 %v477
        %v1042 = vpop.f32.mrb[0].mxu0
        %v1043 = vadd.f32 %v969, %v1042
        %v1044 = vpop.f32.mrb[0].mxu0
        %1045 = vmatprep.mubr.f32.mxu0 0.0
        %1046 = vmatmul.mubr.f32.gmra.mrb[0].mxu0 %v478
        %v1047 = vpop.f32.mrb[0].mxu0
        %v1048 = vadd.f32 %v969, %v1047
        %v1049 = vpop.f32.mrb[0].mxu0
        %1050 = vmatprep.mubr.f32.mxu0 0.0
        %1051 = vmatmul.mubr.f32.gmra.mrb[0].mxu0 %v479
        %v1052 = vpop.f32.mrb[0].mxu0
        %v1053 = vadd.f32 %v969, %v1052
        %v1054 = vpop.f32.mrb[0].mxu0
        %1055 = vmatprep.mubr.f32.mxu0 0.0
        %1056 = vmatmul.mubr.f32.gmra.mrb[0].mxu0 %v480
        %v1057 = vpop.f32.mrb[0].mxu0
        %v1058 = vadd.f32 %v969, %v1057
        %v1059 = vpop.f32.mrb[0].mxu0
        %1060 = vmatprep.mubr.f32.mxu0 0.0
        %1061 = vmatmul.mubr.f32.gmra.mrb[0].mxu0 %v481
        %v1062 = vpop.f32.mrb[0].mxu0
        %v1063 = vadd.f32 %v969, %v1062
        %v1064 = vpop.f32.mrb[0].mxu0
        %1065 = vmatprep.mubr.f32.mxu0 0.0
        %1066 = vmatmul.mubr.f32.gmra.mrb[0].mxu0 %v482
        %v1067 = vpop.f32.mrb[0].mxu0
        %v1068 = vadd.f32 %v969, %v1067
        %v1069 = vpop.f32.mrb[0].mxu0
        %1070 = vmatprep.mubr.f32.mxu0 0.0
        %1071 = vmatmul.mubr.f32.gmra.mrb[0].mxu0 %v483
        %v1072 = vpop.f32.mrb[0].mxu0
        %v1073 = vadd.f32 %v969, %v1072
        %v1074 = vpop.f32.mrb[0].mxu0
        %1075 = vmatprep.mubr.f32.mxu0 0.0
        %1076 = vmatmul.mubr.f32.gmra.mrb[0].mxu0 %v484
        %v1077 = vpop.f32.mrb[0].mxu0
        %v1078 = vadd.f32 %v969, %v1077
        %v1079 = vpop.f32.mrb[0].mxu0
        %1080 = vmatprep.mubr.f32.mxu0 0.0
        %1081 = vmatmul.mubr.f32.gmra.mrb[0].mxu0 %v485
        %v1082 = vpop.f32.mrb[0].mxu0
        %v1083 = vadd.f32 %v969, %v1082
        %v1084 = vpop.f32.mrb[0].mxu0
        %1085 = vmatprep.mubr.f32.mxu0 0.0
        %1086 = vmatmul.mubr.f32.gmra.mrb[0].mxu0 %v486
        %v1087 = vpop.f32.mrb[0].mxu0
        %v1088 = vadd.f32 %v969, %v1087
        %v1089 = vpop.f32.mrb[0].mxu0
        %1090 = vmatprep.mubr.f32.mxu0 0.0
        %1091 = vmatmul.mubr.f32.gmra.mrb[0].mxu0 %v487
        %v1092 = vpop.f32.mrb[0].mxu0
        %v1093 = vadd.f32 %v969, %v1092
        %v1094 = vpop.f32.mrb[0].mxu0
        %1095 = vmatprep.mubr.f32.mxu0 0.0
        %1096 = vmatmul.mubr.f32.gmra.mrb[0].mxu0 %v488
        %v1097 = vpop.f32.mrb[0].mxu0
        %v1098 = vadd.f32 %v969, %v1097
        %v1099 = vpop.f32.mrb[0].mxu0
        %1100 = vmatprep.mubr.f32.mxu0 0.0
        %1101 = vmatmul.mubr.f32.gmra.mrb[0].mxu0 %v489
        %v1102 = vpop.f32.mrb[0].mxu0
        %v1103 = vadd.f32 %v969, %v1102
        %v1104 = vpop.f32.mrb[0].mxu0
        %1105 = vmatprep.mubr.f32.mxu0 0.0
        %1106 = vmatmul.mubr.f32.gmra.mrb[0].mxu0 %v490
        %v1107 = vpop.f32.mrb[0].mxu0
        %v1108 = vadd.f32 %v969, %v1107
        %v1109 = vpop.f32.mrb[0].mxu0
        %1110 = vmatprep.mubr.f32.mxu0 0.0
        %1111 = vmatmul.mubr.f32.gmra.mrb[0].mxu0 %v491
        %v1112 = vpop.f32.mrb[0].mxu0
        %v1113 = vadd.f32 %v969, %v1112
        %v1114 = vpop.f32.mrb[0].mxu0
        %1115 = vmatprep.mubr.f32.mxu0 0.0
        %1116 = vmatmul.mubr.f32.gmra.mrb[0].mxu0 %v492
        %v1117 = vpop.f32.mrb[0].mxu0
        %v1118 = vadd.f32 %v969, %v1117
        %v1119 = vpop.f32.mrb[0].mxu0
        %1120 = vmatprep.mubr.f32.mxu0 0.0
        %1121 = vmatmul.mubr.f32.gmra.mrb[0].mxu0 %v493
        %v1122 = vpop.f32.mrb[0].mxu0
        %v1123 = vadd.f32 %v969, %v1122
        %v1124 = vpop.f32.mrb[0].mxu0
        %1125 = vmatprep.mubr.f32.mxu0 0.0
        %1126 = vmatmul.mubr.f32.gmra.mrb[0].mxu0 %v494
        %v1127 = vpop.f32.mrb[0].mxu0
        %v1128 = vadd.f32 %v969, %v1127
        %v1129 = vpop.f32.mrb[0].mxu0
        %1130 = vmatprep.mubr.f32.mxu0 0.0
        %1131 = vmatmul.mubr.f32.gmra.mrb[0].mxu0 %v495
        %v1132 = vpop.f32.mrb[0].mxu0
        %v1133 = vadd.f32 %v969, %v1132
        %v1134 = vpop.f32.mrb[0].mxu0
        %1135 = vmatprep.mubr.f32.mxu0 0.0
        %1136 = vmatmul.mubr.f32.gmra.mrb[0].mxu0 %v496
        %v1137 = vpop.f32.mrb[0].mxu0
        %v1138 = vadd.f32 %v969, %v1137
        %v1139 = vpop.f32.mrb[0].mxu0
        %1140 = vmatprep.mubr.f32.mxu0 0.0
        %1141 = vmatmul.mubr.f32.gmra.mrb[0].mxu0 %v497
        %v1142 = vpop.f32.mrb[0].mxu0
        %v1143 = vadd.f32 %v969, %v1142
        %v1144 = vpop.f32.mrb[0].mxu0
        %1145 = vmatprep.mubr.f32.mxu0 0.0
        %1146 = vmatmul.mubr.f32.gmra.mrb[0].mxu0 %v498
        %v1147 = vpop.f32.mrb[0].mxu0
        %v1148 = vadd.f32 %v969, %v1147
        %v1149 = vpop.f32.mrb[0].mxu0
        %1150 = vmatprep.mubr.f32.mxu0 0.0
        %1151 = vmatmul.mubr.f32.gmra.mrb[0].mxu0 %v499
        %v1152 = vpop.f32.mrb[0].mxu0
        %v1153 = vadd.f32 %v969, %v1152
        %v1154 = vpop.f32.mrb[0].mxu0
        %1155 = vmatprep.mubr.f32.mxu0 0.0
        %1156 = vmatmul.mubr.f32.gmra.mrb[0].mxu0 %v500
        %v1157 = vpop.f32.mrb[0].mxu0
        %v1158 = vadd.f32 %v969, %v1157
        %v1159 = vpop.f32.mrb[0].mxu0
        %1160 = vmatprep.mubr.f32.mxu0 0.0
        %1161 = vmatmul.mubr.f32.gmra.mrb[0].mxu0 %v501
        %v1162 = vpop.f32.mrb[0].mxu0
        %v1163 = vadd.f32 %v969, %v1162
        %v1164 = vpop.f32.mrb[0].mxu0
        %1165 = vmatprep.mubr.f32.mxu0 0.0
        %1166 = vmatmul.mubr.f32.gmra.mrb[0].mxu0 %v502
        %v1167 = vpop.f32.mrb[0].mxu0
        %v1168 = vadd.f32 %v969, %v1167
        %v1169 = vpop.f32.mrb[0].mxu0
        %1170 = vmatprep.mubr.f32.mxu0 0.0
        %1171 = vmatmul.mubr.f32.gmra.mrb[0].mxu0 %v503
        %v1172 = vpop.f32.mrb[0].mxu0
        %v1173 = vadd.f32 %v969, %v1172
        %v1174 = vpop.f32.mrb[0].mxu0
        %1175 = vmatprep.mubr.f32.mxu0 0.0
        %1176 = vmatmul.mubr.f32.gmra.mrb[0].mxu0 %v504
        %v1177 = vpop.f32.mrb[0].mxu0
        %v1178 = vadd.f32 %v969, %v1177
        %v1179 = vpop.f32.mrb[0].mxu0
        %1180 = vmatprep.mubr.f32.mxu0 0.0
        %1181 = vmatmul.mubr.f32.gmra.mrb[0].mxu0 %v505
        %v1182 = vpop.f32.mrb[0].mxu0
        %v1183 = vadd.f32 %v969, %v1182
        %v1184 = vpop.f32.mrb[0].mxu0
        %1185 = vmatprep.mubr.f32.mxu0 0.0
        %1186 = vmatmul.mubr.f32.gmra.mrb[0].mxu0 %v506
        %v1187 = vpop.f32.mrb[0].mxu0
        %v1188 = vadd.f32 %v969, %v1187
        %v1189 = vpop.f32.mrb[0].mxu0
        %1190 = vmatprep.mubr.f32.mxu0 0.0
        %1191 = vmatmul.mubr.f32.gmra.mrb[0].mxu0 %v507
        %v1192 = vpop.f32.mrb[0].mxu0
        %v1193 = vadd.f32 %v969, %v1192
        %v1194 = vpop.f32.mrb[0].mxu0
        %1195 = vdwg.mxu0
        %v1196 = vpack.c.bf16 %v1043, %v1038
        %v1197 = vpack.c.bf16 %v1053, %v1048
        %v1198 = vpack.c.bf16 %v1063, %v1058
        %v1199 = vpack.c.bf16 %v1073, %v1068
        %v1200 = vpack.c.bf16 %v1083, %v1078
        %v1201 = vpack.c.bf16 %v1093, %v1088
        %v1202 = vpack.c.bf16 %v1103, %v1098
        %v1203 = vpack.c.bf16 %v1113, %v1108
        %v1204 = vpack.c.bf16 %v1123, %v1118
        %v1205 = vpack.c.bf16 %v1133, %v1128
        %v1206 = vpack.c.bf16 %v1143, %v1138
        %v1207 = vpack.c.bf16 %v1153, %v1148
        %v1208 = vpack.c.bf16 %v1163, %v1158
        %v1209 = vpack.c.bf16 %v1173, %v1168
        %v1210 = vpack.c.bf16 %v1183, %v1178
        %v1211 = vpack.c.bf16 %v1193, %v1188
        %v1228 = vunpack.c.l.b16 %v1196
        %v1229 = vunpack.c.h.b16 %v1196
        %v1230 = vunpack.c.l.b16 %v1197
        %v1231 = vunpack.c.h.b16 %v1197
        %v1232 = vunpack.c.l.b16 %v1198
        %v1233 = vunpack.c.h.b16 %v1198
        %v1234 = vunpack.c.l.b16 %v1199
        %v1235 = vunpack.c.h.b16 %v1199
        %v1236 = vunpack.c.l.b16 %v1200
        %v1237 = vunpack.c.h.b16 %v1200
        %v1238 = vunpack.c.l.b16 %v1201
        %v1239 = vunpack.c.h.b16 %v1201
        %v1240 = vunpack.c.l.b16 %v1202
        %v1241 = vunpack.c.h.b16 %v1202
        %v1242 = vunpack.c.l.b16 %v1203
        %v1243 = vunpack.c.h.b16 %v1203
        %v1244 = vunpack.c.l.b16 %v1204
        %v1245 = vunpack.c.h.b16 %v1204
        %v1246 = vunpack.c.l.b16 %v1205
        %v1247 = vunpack.c.h.b16 %v1205
        %v1248 = vunpack.c.l.b16 %v1206
        %v1249 = vunpack.c.h.b16 %v1206
        %v1250 = vunpack.c.l.b16 %v1207
        %v1251 = vunpack.c.h.b16 %v1207
        %v1252 = vunpack.c.l.b16 %v1208
        %v1253 = vunpack.c.h.b16 %v1208
        %v1254 = vunpack.c.l.b16 %v1209
        %v1255 = vunpack.c.h.b16 %v1209
        %v1256 = vunpack.c.l.b16 %v1210
        %v1257 = vunpack.c.h.b16 %v1210
        %v1258 = vunpack.c.l.b16 %v1211
        %v1259 = vunpack.c.h.b16 %v1211
        %v1260 = vpack.c.b16 %v1228, %v1228
        %v1261 = vpack.c.b16 %v1229, %v1229
        %v1262 = vpack.c.b16 %v1230, %v1230
        %v1263 = vpack.c.b16 %v1231, %v1231
        %v1264 = vpack.c.b16 %v1232, %v1232
        %v1265 = vpack.c.b16 %v1233, %v1233
        %v1266 = vpack.c.b16 %v1234, %v1234
        %v1267 = vpack.c.b16 %v1235, %v1235
        %v1268 = vpack.c.b16 %v1236, %v1236
        %v1269 = vpack.c.b16 %v1237, %v1237
        %v1270 = vpack.c.b16 %v1238, %v1238
        %v1271 = vpack.c.b16 %v1239, %v1239
        %v1272 = vpack.c.b16 %v1240, %v1240
        %v1273 = vpack.c.b16 %v1241, %v1241
        %v1274 = vpack.c.b16 %v1242, %v1242
        %v1275 = vpack.c.b16 %v1243, %v1243
        %v1276 = vpack.c.b16 %v1244, %v1244
        %v1277 = vpack.c.b16 %v1245, %v1245
        %v1278 = vpack.c.b16 %v1246, %v1246
        %v1279 = vpack.c.b16 %v1247, %v1247
        %v1280 = vpack.c.b16 %v1248, %v1248
        %v1281 = vpack.c.b16 %v1249, %v1249
        %v1282 = vpack.c.b16 %v1250, %v1250
        %v1283 = vpack.c.b16 %v1251, %v1251
        %v1284 = vpack.c.b16 %v1252, %v1252
        %v1285 = vpack.c.b16 %v1253, %v1253
        %v1286 = vpack.c.b16 %v1254, %v1254
        %v1287 = vpack.c.b16 %v1255, %v1255
        %v1288 = vpack.c.b16 %v1256, %v1256
        %v1289 = vpack.c.b16 %v1257, %v1257
        %v1290 = vpack.c.b16 %v1258, %v1258
        %v1291 = vpack.c.b16 %v1259, %v1259
        %1324 = vst [vmem:[%s464] sm:$0xf] %v1260
        %1325 = vst [vmem:[%s464 + $0x4] sm:$0xf] %v1261
        %1326 = vst [vmem:[%s464 + $0x8] sm:$0xf] %v1262
        %1327 = vst [vmem:[%s464 + $0xc] sm:$0xf] %v1263
        %1328 = vst [vmem:[%s464 + $0x10] sm:$0xf] %v1264
        %1329 = vst [vmem:[%s464 + $0x14] sm:$0xf] %v1265
        %1330 = vst [vmem:[%s464 + $0x18] sm:$0xf] %v1266
        %1331 = vst [vmem:[%s464 + $0x1c] sm:$0xf] %v1267
        %1332 = vst [vmem:[%s464 + $0x20] sm:$0xf] %v1268
        %1333 = vst [vmem:[%s464 + $0x24] sm:$0xf] %v1269
        %1334 = vst [vmem:[%s464 + $0x28] sm:$0xf] %v1270
        %1335 = vst [vmem:[%s464 + $0x2c] sm:$0xf] %v1271
        %1336 = vst [vmem:[%s464 + $0x30] sm:$0xf] %v1272
        %1337 = vst [vmem:[%s464 + $0x34] sm:$0xf] %v1273
        %1338 = vst [vmem:[%s464 + $0x38] sm:$0xf] %v1274
        %1339 = vst [vmem:[%s464 + $0x3c] sm:$0xf] %v1275
        %1340 = vst [vmem:[%s464 + $0x40] sm:$0xf] %v1276
        %1341 = vst [vmem:[%s464 + $0x44] sm:$0xf] %v1277
        %1342 = vst [vmem:[%s464 + $0x48] sm:$0xf] %v1278
        %1343 = vst [vmem:[%s464 + $0x4c] sm:$0xf] %v1279
        %1344 = vst [vmem:[%s464 + $0x50] sm:$0xf] %v1280
        %1345 = vst [vmem:[%s464 + $0x54] sm:$0xf] %v1281
        %1346 = vst [vmem:[%s464 + $0x58] sm:$0xf] %v1282
        %1347 = vst [vmem:[%s464 + $0x5c] sm:$0xf] %v1283
        %1348 = vst [vmem:[%s464 + $0x60] sm:$0xf] %v1284
        %1349 = vst [vmem:[%s464 + $0x64] sm:$0xf] %v1285
        %1350 = vst [vmem:[%s464 + $0x68] sm:$0xf] %v1286
        %1351 = vst [vmem:[%s464 + $0x6c] sm:$0xf] %v1287
        %1352 = vst [vmem:[%s464 + $0x70] sm:$0xf] %v1288
        %1353 = vst [vmem:[%s464 + $0x74] sm:$0xf] %v1289
        %1354 = vst [vmem:[%s464 + $0x78] sm:$0xf] %v1290
        %1355 = vst [vmem:[%s464 + $0x7c] sm:$0xf] %v1291
        %v1356 = vld [vmem:[#allocation11] sm:$0xff]
        %v1357 = vld [vmem:[#allocation11 + $0x8] sm:$0xff]
        %v1358 = vld [vmem:[#allocation11 + $0x10] sm:$0xff]
        %v1359 = vld [vmem:[#allocation11 + $0x18] sm:$0xff]
        %v1360 = vld [vmem:[#allocation11 + $0x20] sm:$0xff]
        %v1361 = vld [vmem:[#allocation11 + $0x28] sm:$0xff]
        %v1362 = vld [vmem:[#allocation11 + $0x30] sm:$0xff]
        %v1363 = vld [vmem:[#allocation11 + $0x38] sm:$0xff]
        %v1364 = vld [vmem:[#allocation11 + $0x40] sm:$0xff]
        %v1365 = vld [vmem:[#allocation11 + $0x48] sm:$0xff]
        %v1366 = vld [vmem:[#allocation11 + $0x50] sm:$0xff]
        %v1367 = vld [vmem:[#allocation11 + $0x58] sm:$0xff]
        %v1368 = vld [vmem:[#allocation11 + $0x60] sm:$0xff]
        %v1369 = vld [vmem:[#allocation11 + $0x68] sm:$0xff]
        %v1370 = vld [vmem:[#allocation11 + $0x70] sm:$0xff]
        %v1371 = vld [vmem:[#allocation11 + $0x78] sm:$0xff]
        %v1372 = vld [vmem:[#allocation13] sm:$0x1]
        %v1374 = vlaneseq
        %v1375 = vshrl.u32 %v1374, 7
        %v1376 = vsub.s32 0, %v1375
        %v1377 = vrot.slane %v1372, %v1376
        %1379 = vmatprep.subr.mxu0 0.0
        %1380 = vmatpush1.msra.mxu0 %v1356
        %1381 = vmatprep.subr.mxu0 0.0
        %1382 = vmatpush1.msra.mxu0 %v1357
        %1383 = vmatprep.subr.mxu0 0.0
        %1384 = vmatpush1.msra.mxu0 %v1358
        %1385 = vmatprep.subr.mxu0 0.0
        %1386 = vmatpush1.msra.mxu0 %v1359
        %1387 = vmatprep.subr.mxu0 0.0
        %1388 = vmatpush1.msra.mxu0 %v1360
        %1389 = vmatprep.subr.mxu0 0.0
        %1390 = vmatpush1.msra.mxu0 %v1361
        %1391 = vmatprep.subr.mxu0 0.0
        %1392 = vmatpush1.msra.mxu0 %v1362
        %1393 = vmatprep.subr.mxu0 0.0
        %1394 = vmatpush1.msra.mxu0 %v1363
        %1395 = vmatprep.subr.mxu0 0.0
        %1396 = vmatpush1.msra.mxu0 %v1364
        %1397 = vmatprep.subr.mxu0 0.0
        %1398 = vmatpush1.msra.mxu0 %v1365
        %1399 = vmatprep.subr.mxu0 0.0
        %1400 = vmatpush1.msra.mxu0 %v1366
        %1401 = vmatprep.subr.mxu0 0.0
        %1402 = vmatpush1.msra.mxu0 %v1367
        %1403 = vmatprep.subr.mxu0 0.0
        %1404 = vmatpush1.msra.mxu0 %v1368
        %1405 = vmatprep.subr.mxu0 0.0
        %1406 = vmatpush1.msra.mxu0 %v1369
        %1407 = vmatprep.subr.mxu0 0.0
        %1408 = vmatpush1.msra.mxu0 %v1370
        %1409 = vmatprep.subr.mxu0 0.0
        %1410 = vmatpush1.msra.mxu0 %v1371
        %1411 = vmatprep.subr.mxu0 0.0
        %1412 = vmatpush1.msra.mxu0 0.0
        %1413 = vmatprep.subr.mxu0 0.0
        %1414 = vmatpush1.msra.mxu0 0.0
        %1415 = vmatprep.subr.mxu0 0.0
        %1416 = vmatpush1.msra.mxu0 0.0
        %1417 = vmatprep.subr.mxu0 0.0
        %1418 = vmatpush1.msra.mxu0 0.0
        %1419 = vmatprep.subr.mxu0 0.0
        %1420 = vmatpush1.msra.mxu0 0.0
        %1421 = vmatprep.subr.mxu0 0.0
        %1422 = vmatpush1.msra.mxu0 0.0
        %1423 = vmatprep.subr.mxu0 0.0
        %1424 = vmatpush1.msra.mxu0 0.0
        %1425 = vmatprep.subr.mxu0 0.0
        %1426 = vmatpush1.msra.mxu0 0.0
        %1427 = vmatprep.subr.mxu0 0.0
        %1428 = vmatpush1.msra.mxu0 0.0
        %1429 = vmatprep.subr.mxu0 0.0
        %1430 = vmatpush1.msra.mxu0 0.0
        %1431 = vmatprep.subr.mxu0 0.0
        %1432 = vmatpush1.msra.mxu0 0.0
        %1433 = vmatprep.subr.mxu0 0.0
        %1434 = vmatpush1.msra.mxu0 0.0
        %1435 = vmatprep.subr.mxu0 0.0
        %1436 = vmatpush1.msra.mxu0 0.0
        %1437 = vmatprep.subr.mxu0 0.0
        %1438 = vmatpush1.msra.mxu0 0.0
        %1439 = vmatprep.subr.mxu0 0.0
        %1440 = vmatpush1.msra.mxu0 0.0
        %1441 = vmatprep.subr.mxu0 0.0
        %1442 = vmatpush1.msra.mxu0 0.0
        %1443 = vmatprep.mubr.f32.mxu0 0.0
        %1444 = vmatmul.mubr.f32.gmra.mrb[0].mxu0 %v476
        %v1445 = vpop.f32.mrb[0].mxu0
        %v1446 = vadd.f32 %v1377, %v1445
        %v1447 = vpop.f32.mrb[0].mxu0
        %1448 = vmatprep.mubr.f32.mxu0 0.0
        %1449 = vmatmul.mubr.f32.gmra.mrb[0].mxu0 %v477
        %v1450 = vpop.f32.mrb[0].mxu0
        %v1451 = vadd.f32 %v1377, %v1450
        %v1452 = vpop.f32.mrb[0].mxu0
        %1453 = vmatprep.mubr.f32.mxu0 0.0
        %1454 = vmatmul.mubr.f32.gmra.mrb[0].mxu0 %v478
        %v1455 = vpop.f32.mrb[0].mxu0
        %v1456 = vadd.f32 %v1377, %v1455
        %v1457 = vpop.f32.mrb[0].mxu0
        %1458 = vmatprep.mubr.f32.mxu0 0.0
        %1459 = vmatmul.mubr.f32.gmra.mrb[0].mxu0 %v479
        %v1460 = vpop.f32.mrb[0].mxu0
        %v1461 = vadd.f32 %v1377, %v1460
        %v1462 = vpop.f32.mrb[0].mxu0
        %1463 = vmatprep.mubr.f32.mxu0 0.0
        %1464 = vmatmul.mubr.f32.gmra.mrb[0].mxu0 %v480
        %v1465 = vpop.f32.mrb[0].mxu0
        %v1466 = vadd.f32 %v1377, %v1465
        %v1467 = vpop.f32.mrb[0].mxu0
        %1468 = vmatprep.mubr.f32.mxu0 0.0
        %1469 = vmatmul.mubr.f32.gmra.mrb[0].mxu0 %v481
        %v1470 = vpop.f32.mrb[0].mxu0
        %v1471 = vadd.f32 %v1377, %v1470
        %v1472 = vpop.f32.mrb[0].mxu0
        %1473 = vmatprep.mubr.f32.mxu0 0.0
        %1474 = vmatmul.mubr.f32.gmra.mrb[0].mxu0 %v482
        %v1475 = vpop.f32.mrb[0].mxu0
        %v1476 = vadd.f32 %v1377, %v1475
        %v1477 = vpop.f32.mrb[0].mxu0
        %1478 = vmatprep.mubr.f32.mxu0 0.0
        %1479 = vmatmul.mubr.f32.gmra.mrb[0].mxu0 %v483
        %v1480 = vpop.f32.mrb[0].mxu0
        %v1481 = vadd.f32 %v1377, %v1480
        %v1482 = vpop.f32.mrb[0].mxu0
        %1483 = vmatprep.mubr.f32.mxu0 0.0
        %1484 = vmatmul.mubr.f32.gmra.mrb[0].mxu0 %v484
        %v1485 = vpop.f32.mrb[0].mxu0
        %v1486 = vadd.f32 %v1377, %v1485
        %v1487 = vpop.f32.mrb[0].mxu0
        %1488 = vmatprep.mubr.f32.mxu0 0.0
        %1489 = vmatmul.mubr.f32.gmra.mrb[0].mxu0 %v485
        %v1490 = vpop.f32.mrb[0].mxu0
        %v1491 = vadd.f32 %v1377, %v1490
        %v1492 = vpop.f32.mrb[0].mxu0
        %1493 = vmatprep.mubr.f32.mxu0 0.0
        %1494 = vmatmul.mubr.f32.gmra.mrb[0].mxu0 %v486
        %v1495 = vpop.f32.mrb[0].mxu0
        %v1496 = vadd.f32 %v1377, %v1495
        %v1497 = vpop.f32.mrb[0].mxu0
        %1498 = vmatprep.mubr.f32.mxu0 0.0
        %1499 = vmatmul.mubr.f32.gmra.mrb[0].mxu0 %v487
        %v1500 = vpop.f32.mrb[0].mxu0
        %v1501 = vadd.f32 %v1377, %v1500
        %v1502 = vpop.f32.mrb[0].mxu0
        %1503 = vmatprep.mubr.f32.mxu0 0.0
        %1504 = vmatmul.mubr.f32.gmra.mrb[0].mxu0 %v488
        %v1505 = vpop.f32.mrb[0].mxu0
        %v1506 = vadd.f32 %v1377, %v1505
        %v1507 = vpop.f32.mrb[0].mxu0
        %1508 = vmatprep.mubr.f32.mxu0 0.0
        %1509 = vmatmul.mubr.f32.gmra.mrb[0].mxu0 %v489
        %v1510 = vpop.f32.mrb[0].mxu0
        %v1511 = vadd.f32 %v1377, %v1510
        %v1512 = vpop.f32.mrb[0].mxu0
        %1513 = vmatprep.mubr.f32.mxu0 0.0
        %1514 = vmatmul.mubr.f32.gmra.mrb[0].mxu0 %v490
        %v1515 = vpop.f32.mrb[0].mxu0
        %v1516 = vadd.f32 %v1377, %v1515
        %v1517 = vpop.f32.mrb[0].mxu0
        %1518 = vmatprep.mubr.f32.mxu0 0.0
        %1519 = vmatmul.mubr.f32.gmra.mrb[0].mxu0 %v491
        %v1520 = vpop.f32.mrb[0].mxu0
        %v1521 = vadd.f32 %v1377, %v1520
        %v1522 = vpop.f32.mrb[0].mxu0
        %1523 = vmatprep.mubr.f32.mxu0 0.0
        %1524 = vmatmul.mubr.f32.gmra.mrb[0].mxu0 %v492
        %v1525 = vpop.f32.mrb[0].mxu0
        %v1526 = vadd.f32 %v1377, %v1525
        %v1527 = vpop.f32.mrb[0].mxu0
        %1528 = vmatprep.mubr.f32.mxu0 0.0
        %1529 = vmatmul.mubr.f32.gmra.mrb[0].mxu0 %v493
        %v1530 = vpop.f32.mrb[0].mxu0
        %v1531 = vadd.f32 %v1377, %v1530
        %v1532 = vpop.f32.mrb[0].mxu0
        %1533 = vmatprep.mubr.f32.mxu0 0.0
        %1534 = vmatmul.mubr.f32.gmra.mrb[0].mxu0 %v494
        %v1535 = vpop.f32.mrb[0].mxu0
        %v1536 = vadd.f32 %v1377, %v1535
        %v1537 = vpop.f32.mrb[0].mxu0
        %1538 = vmatprep.mubr.f32.mxu0 0.0
        %1539 = vmatmul.mubr.f32.gmra.mrb[0].mxu0 %v495
        %v1540 = vpop.f32.mrb[0].mxu0
        %v1541 = vadd.f32 %v1377, %v1540
        %v1542 = vpop.f32.mrb[0].mxu0
        %1543 = vmatprep.mubr.f32.mxu0 0.0
        %1544 = vmatmul.mubr.f32.gmra.mrb[0].mxu0 %v496
        %v1545 = vpop.f32.mrb[0].mxu0
        %v1546 = vadd.f32 %v1377, %v1545
        %v1547 = vpop.f32.mrb[0].mxu0
        %1548 = vmatprep.mubr.f32.mxu0 0.0
        %1549 = vmatmul.mubr.f32.gmra.mrb[0].mxu0 %v497
        %v1550 = vpop.f32.mrb[0].mxu0
        %v1551 = vadd.f32 %v1377, %v1550
        %v1552 = vpop.f32.mrb[0].mxu0
        %1553 = vmatprep.mubr.f32.mxu0 0.0
        %1554 = vmatmul.mubr.f32.gmra.mrb[0].mxu0 %v498
        %v1555 = vpop.f32.mrb[0].mxu0
        %v1556 = vadd.f32 %v1377, %v1555
        %v1557 = vpop.f32.mrb[0].mxu0
        %1558 = vmatprep.mubr.f32.mxu0 0.0
        %1559 = vmatmul.mubr.f32.gmra.mrb[0].mxu0 %v499
        %v1560 = vpop.f32.mrb[0].mxu0
        %v1561 = vadd.f32 %v1377, %v1560
        %v1562 = vpop.f32.mrb[0].mxu0
        %1563 = vmatprep.mubr.f32.mxu0 0.0
        %1564 = vmatmul.mubr.f32.gmra.mrb[0].mxu0 %v500
        %v1565 = vpop.f32.mrb[0].mxu0
        %v1566 = vadd.f32 %v1377, %v1565
        %v1567 = vpop.f32.mrb[0].mxu0
        %1568 = vmatprep.mubr.f32.mxu0 0.0
        %1569 = vmatmul.mubr.f32.gmra.mrb[0].mxu0 %v501
        %v1570 = vpop.f32.mrb[0].mxu0
        %v1571 = vadd.f32 %v1377, %v1570
        %v1572 = vpop.f32.mrb[0].mxu0
        %1573 = vmatprep.mubr.f32.mxu0 0.0
        %1574 = vmatmul.mubr.f32.gmra.mrb[0].mxu0 %v502
        %v1575 = vpop.f32.mrb[0].mxu0
        %v1576 = vadd.f32 %v1377, %v1575
        %v1577 = vpop.f32.mrb[0].mxu0
        %1578 = vmatprep.mubr.f32.mxu0 0.0
        %1579 = vmatmul.mubr.f32.gmra.mrb[0].mxu0 %v503
        %v1580 = vpop.f32.mrb[0].mxu0
        %v1581 = vadd.f32 %v1377, %v1580
        %v1582 = vpop.f32.mrb[0].mxu0
        %1583 = vmatprep.mubr.f32.mxu0 0.0
        %1584 = vmatmul.mubr.f32.gmra.mrb[0].mxu0 %v504
        %v1585 = vpop.f32.mrb[0].mxu0
        %v1586 = vadd.f32 %v1377, %v1585
        %v1587 = vpop.f32.mrb[0].mxu0
        %1588 = vmatprep.mubr.f32.mxu0 0.0
        %1589 = vmatmul.mubr.f32.gmra.mrb[0].mxu0 %v505
        %v1590 = vpop.f32.mrb[0].mxu0
        %v1591 = vadd.f32 %v1377, %v1590
        %v1592 = vpop.f32.mrb[0].mxu0
        %1593 = vmatprep.mubr.f32.mxu0 0.0
        %1594 = vmatmul.mubr.f32.gmra.mrb[0].mxu0 %v506
        %v1595 = vpop.f32.mrb[0].mxu0
        %v1596 = vadd.f32 %v1377, %v1595
        %v1597 = vpop.f32.mrb[0].mxu0
        %1598 = vmatprep.mubr.f32.mxu0 0.0
        %1599 = vmatmul.mubr.f32.gmra.mrb[0].mxu0 %v507
        %v1600 = vpop.f32.mrb[0].mxu0
        %v1601 = vadd.f32 %v1377, %v1600
        %v1602 = vpop.f32.mrb[0].mxu0
        %1603 = vdwg.mxu0
        %1604 = vst [vmem:[%s471] sm:$0xff] %v1446
        %1605 = vst [vmem:[%s471 + $0x8] sm:$0xff] %v1451
        %1606 = vst [vmem:[%s471 + $0x10] sm:$0xff] %v1456
        %1607 = vst [vmem:[%s471 + $0x18] sm:$0xff] %v1461
        %1608 = vst [vmem:[%s471 + $0x20] sm:$0xff] %v1466
        %1609 = vst [vmem:[%s471 + $0x28] sm:$0xff] %v1471
        %1610 = vst [vmem:[%s471 + $0x30] sm:$0xff] %v1476
        %1611 = vst [vmem:[%s471 + $0x38] sm:$0xff] %v1481
        %1612 = vst [vmem:[%s471 + $0x40] sm:$0xff] %v1486
        %1613 = vst [vmem:[%s471 + $0x48] sm:$0xff] %v1491
        %1614 = vst [vmem:[%s471 + $0x50] sm:$0xff] %v1496
        %1615 = vst [vmem:[%s471 + $0x58] sm:$0xff] %v1501
        %1616 = vst [vmem:[%s471 + $0x60] sm:$0xff] %v1506
        %1617 = vst [vmem:[%s471 + $0x68] sm:$0xff] %v1511
        %1618 = vst [vmem:[%s471 + $0x70] sm:$0xff] %v1516
        %1619 = vst [vmem:[%s471 + $0x78] sm:$0xff] %v1521
        %1620 = vst [vmem:[%s471 + $0x80] sm:$0xff] %v1526
        %1621 = vst [vmem:[%s471 + $0x88] sm:$0xff] %v1531
        %1622 = vst [vmem:[%s471 + $0x90] sm:$0xff] %v1536
        %1623 = vst [vmem:[%s471 + $0x98] sm:$0xff] %v1541
        %1624 = vst [vmem:[%s471 + $0xa0] sm:$0xff] %v1546
        %1625 = vst [vmem:[%s471 + $0xa8] sm:$0xff] %v1551
        %1626 = vst [vmem:[%s471 + $0xb0] sm:$0xff] %v1556
        %1627 = vst [vmem:[%s471 + $0xb8] sm:$0xff] %v1561
        %1628 = vst [vmem:[%s471 + $0xc0] sm:$0xff] %v1566
        %1629 = vst [vmem:[%s471 + $0xc8] sm:$0xff] %v1571
        %1630 = vst [vmem:[%s471 + $0xd0] sm:$0xff] %v1576
        %1631 = vst [vmem:[%s471 + $0xd8] sm:$0xff] %v1581
        %1632 = vst [vmem:[%s471 + $0xe0] sm:$0xff] %v1586
        %1633 = vst [vmem:[%s471 + $0xe8] sm:$0xff] %v1591
        %1634 = vst [vmem:[%s471 + $0xf0] sm:$0xff] %v1596
        %1635 = vst [vmem:[%s471 + $0xf8] sm:$0xff] %v1601
        %s1636 = sand.u32 %s209, 1
        %s1637 = scalar_lea.sflag [#allocation4], %s1636
        %s1638 = sand.u32 %s209, 1
        %s1639 = smul.addr %s1638, 128
        %s1640 = scalar_lea.vmem [#allocation14], %s1639
        %s1641 = sand.u32 %s33, 1
        %s1642 = scalar_lea.sflag [#allocation16], %s1641
        %s1643 = sand.u32 %s237, 1
        %s1644 = smul.addr %s1643, 128
        %s1645 = scalar_lea.vmem [#allocation15], %s1644
        %s1646 = sand.u32 %s33, 1
        %s1647 = scalar_lea.sflag [#allocation16], %s1646
        %s1648 = sand.u32 %s265, 1
        %s1649 = smul.addr %s1648, 256
        %s1650 = scalar_lea.vmem [#allocation17], %s1649
        // Predicated region
        $region77: #{tpu_custom_call.1} parent=47 // pred_check
          %p1651 = pneg %p219
        $region78: #{tpu_custom_call.1} parent=47 // pred_check_branch
          %1653 = sbr.rel (%p1651) target = $region80
        $region79: #{tpu_custom_call.1} parent=47 // pred_region
          %s1654 = smul.u32 32, %s38
          %s1656 = ssub.s32 2048, 2048
          %1657 = vsyncadd %s1637, %s1656
          %s1658 = smul.addr %s37, 32
          %s1659 = sadd.s32 %s1654, %s1658
          %s1660 = smul.addr %s1659, 64
          %s1661 = scalar_lea.hbm %s7, %s1660
          %s1662 = sshll.u32 %s1640, 4
          %s1663 = int_to_ptr.vmem [resolvable:$true] %s1662
          %1668 = dma.vmem_to_hbm [thread:$0]  %s1663, 2048, %s1661, %s1637, 64, 64, 4
        $region80: #{tpu_custom_call.1} parent=47 // pred_fallthru
          _
        // Predicated region
        $region81: #{tpu_custom_call.1} parent=47 // pred_check
          %p1669 = pneg %p247
        $region82: #{tpu_custom_call.1} parent=47 // pred_check_branch
          %1671 = sbr.rel (%p1669) target = $region84
        $region83: #{tpu_custom_call.1} parent=47 // pred_region
          %s1672 = smul.u32 32, %s38
          %s1674 = ssub.s32 2048, 2048
          %1675 = vsyncadd %s1642, %s1674
          %s1676 = smul.addr %s37, 32
          %s1677 = sadd.s32 %s1672, %s1676
          %s1678 = smul.addr %s1677, 64
          %s1679 = scalar_lea.hbm %s8, %s1678
          %s1680 = sshll.u32 %s1645, 4
          %s1681 = int_to_ptr.vmem [resolvable:$true] %s1680
          %1686 = dma.vmem_to_hbm [thread:$0]  %s1681, 2048, %s1679, %s1642, 64, 64, 4
        $region84: #{tpu_custom_call.1} parent=47 // pred_fallthru
          _
        // Predicated region
        $region85: #{tpu_custom_call.1} parent=47 // pred_check
          %p1687 = pneg %p275
        $region86: #{tpu_custom_call.1} parent=47 // pred_check_branch
          %1689 = sbr.rel (%p1687) target = $region88
        $region87: #{tpu_custom_call.1} parent=47 // pred_region
          %s1690 = smul.u32 32, %s38
          %s1692 = ssub.s32 4096, 4096
          %1693 = vsyncadd %s1647, %s1692
          %s1694 = smul.addr %s37, 32
          %s1695 = sadd.s32 %s1690, %s1694
          %s1696 = smul.addr %s1695, 128
          %s1697 = scalar_lea.hbm %s9, %s1696
          %s1698 = sshll.u32 %s1650, 4
          %s1699 = int_to_ptr.vmem [resolvable:$true] %s1698
          %1704 = dma.vmem_to_hbm [thread:$0]  %s1699, 4096, %s1697, %s1647, 128, 128, 8
        $region88: #{tpu_custom_call.1} parent=47 // pred_fallthru
          _
      $region48: #{tpu_custom_call.1} parent=5 // pred_fallthru
        _
      %p1705 = scmp.le.s32.totalorder 2, %s28
      // Predicated region
      $region89: #{tpu_custom_call.1} parent=5 // pred_check
        %p1706 = pneg %p1705
      $region90: #{tpu_custom_call.1} parent=5 // pred_check_branch
        %1708 = sbr.rel (%p1706) target = $region92
      $region91: #{tpu_custom_call.1} parent=5 // pred_region
        %s1709 = ssub.s32 %s28, 2
        // Predicated region
        $region93: #{tpu_custom_call.1} parent=91 // pred_check
          %p1710 = pneg %p225
        $region94: #{tpu_custom_call.1} parent=91 // pred_check_branch
          %1712 = sbr.rel (%p1710) target = $region96
        $region95: #{tpu_custom_call.1} parent=91 // pred_region
          %s1713 = sand.u32 %s210, 1
          %s1714 = scalar_lea.sflag [#allocation4], %s1713
          %s1715 = sand.u32 %s210, 1
          %s1716 = smul.addr %s1715, 128
          %s1717 = scalar_lea.vmem [#allocation14], %s1716
          %1718 = dma.done %s1714, 2048
        $region96: #{tpu_custom_call.1} parent=91 // pred_fallthru
          _
        // Predicated region
        $region97: #{tpu_custom_call.1} parent=91 // pred_check
          %p1719 = pneg %p253
        $region98: #{tpu_custom_call.1} parent=91 // pred_check_branch
          %1721 = sbr.rel (%p1719) target = $region100
        $region99: #{tpu_custom_call.1} parent=91 // pred_region
          %s1722 = sand.u32 %s34, 1
          %s1723 = scalar_lea.sflag [#allocation16], %s1722
          %s1724 = sand.u32 %s238, 1
          %s1725 = smul.addr %s1724, 128
          %s1726 = scalar_lea.vmem [#allocation15], %s1725
          %1727 = dma.done %s1723, 2048
        $region100: #{tpu_custom_call.1} parent=91 // pred_fallthru
          _
        // Predicated region
        $region101: #{tpu_custom_call.1} parent=91 // pred_check
          %p1728 = pneg %p281
        $region102: #{tpu_custom_call.1} parent=91 // pred_check_branch
          %1730 = sbr.rel (%p1728) target = $region104
        $region103: #{tpu_custom_call.1} parent=91 // pred_region
          %s1731 = sand.u32 %s34, 1
          %s1732 = scalar_lea.sflag [#allocation16], %s1731
          %s1733 = sand.u32 %s266, 1
          %s1734 = smul.addr %s1733, 256
          %s1735 = scalar_lea.vmem [#allocation17], %s1734
          %1736 = dma.done %s1732, 4096
        $region104: #{tpu_custom_call.1} parent=91 // pred_fallthru
          _
      $region92: #{tpu_custom_call.1} parent=5 // pred_fallthru
        _
    $region6: #{tpu_custom_call.1} parent=1 // loop_footer
      %s32 = sadd.s32 1, %s28
    $region7: #{tpu_custom_call.1} parent=1 // loop_footer_branch
      %27 = sbr.rel target = $region3
    $region8: #{tpu_custom_call.1} parent=1 // loop_exit
      _
    %1737 = vsyncpa [#allocation3], 1
    %s1738 = scalar_lea.sflag [#allocation3], 1
    %1739 = vsyncpa %s1738, 1
    %1740 = vsyncpa [#allocation6], 1
    %1741 = vsyncpa [#allocation9], 1
    %1742 = vsyncpa [#allocation12], 1
    %1743 = vsyncpa [#allocation4], 1
    %s1744 = scalar_lea.sflag [#allocation4], 1
    %1745 = vsyncpa %s1744, 1
    %1746 = vsyncpa [#allocation16], 1
    %s1747 = scalar_lea.sflag [#allocation16], 1
    %1748 = vsyncpa %s1747, 1

</llo_original>
